<compile_context>
chip_gen: v7x
topology: tpu7x:2x2x1
jax: 0.10.0
libtpu: 0.0.40
codegen_flags: <defaults>
</compile_context>

<pallas_src>
import numpy as np
import jax
import jax.numpy as jnp
from jax import lax
from jax.experimental import pallas as pl
from jax.experimental.pallas import tpu as pltpu

VMEM_SPEC = pl.BlockSpec(memory_space=pltpu.MemorySpace.VMEM)


def _round_up(v, m):
    return ((v + m - 1) // m) * m


def _pack_rows(sections, cols, align, dtype):
    """Stack 2-D blocks (rows x <=cols) into one (R, cols) buffer.

    Section starts are aligned to `align` rows (sublane-pack alignment).
    Returns (jnp array of `dtype`, list of row offsets).
    """
    offs, total = [], 0
    for a in sections:
        offs.append(total)
        total += _round_up(a.shape[0], align)
    total = max(total, align)
    buf = np.zeros((total, cols), np.float32)
    for a, o in zip(sections, offs):
        if a.size:
            buf[o:o + a.shape[0], :a.shape[1]] = np.asarray(a, np.float32)
    return jnp.asarray(buf, dtype), offs


# ----------------------------------------------------------------------------
# Fused forward kernel (factory closes over static sizes / pack offsets)
# ----------------------------------------------------------------------------
def make_fused_kernel(n, f_in, hidden, n_classes, g, n_extra, pack_w,
                      g_offs, w_offs, b_offs):
    f32, bf16 = jnp.float32, jnp.bfloat16
    o_an, o_adj, o_mask, o_maskt, o_x = g_offs
    o_w1, o_convs, o_c1w, o_l1w, o_c2w, o_l2w = w_offs
    o_b1, o_bconvs, o_c1b, o_c2b, o_l1b, o_l2b, o_noise = b_offs

    def dot32(a, b):                       # bf16 x bf16 -> f32 accumulate
        return jnp.dot(a, b, preferred_element_type=f32)

    def dot_t(a, b):                       # a:(K,M), b:(K,N) -> a^T @ b (f32)
        return lax.dot_general(a, b, (((0,), (0,)), ((), ())),
                               preferred_element_type=f32)

    def kernel(gp_ref, wp_ref, bn_ref, o_ref):
        # ----------------------- unpack operands (VMEM) ----------------------
        a_bf = gp_ref[o_an:o_an + n, :n]                  # normalized adjacency
        adj_bf = gp_ref[o_adj:o_adj + n, :n]              # raw adjacency
        mask_f = gp_ref[o_mask:o_mask + g, :n].astype(f32)    # (G, N) one-hot
        maskt = gp_ref[o_maskt:o_maskt + n, :g].astype(f32)   # (N, G) transpose
        x_bf = gp_ref[o_x:o_x + n, :f_in]

        w1 = wp_ref[o_w1:o_w1 + f_in, :]
        c1w = wp_ref[o_c1w:o_c1w + hidden, :]
        l1w = wp_ref[o_l1w:o_l1w + hidden, :]
        c2w = wp_ref[o_c2w:o_c2w + hidden, :2]
        l2w = wp_ref[o_l2w:o_l2w + hidden, :n_classes]

        b1 = bn_ref[o_b1:o_b1 + 1, :]
        c1b = bn_ref[o_c1b:o_c1b + 1, :]
        c2b = bn_ref[o_c2b:o_c2b + 1, :2]
        l1b = bn_ref[o_l1b:o_l1b + 1, :]
        l2b = bn_ref[o_l2b:o_l2b + 1, :n_classes]
        noise = bn_ref[o_noise:o_noise + g, :]

        # --------- GCN stack:  h <- A_norm @ (h W) + b   (bf16 MXU) ----------
        h = dot32(a_bf, dot32(x_bf, w1).astype(bf16)) + b1
        for i in range(n_extra):            # unrolled; weights stay in VMEM
            wk = wp_ref[o_convs + i * hidden:o_convs + (i + 1) * hidden, :]
            bk = bn_ref[o_bconvs + i:o_bconvs + i + 1, :]
            h = dot32(a_bf, dot32(h.astype(bf16), wk).astype(bf16)) + bk

        # ---------- assignment = softmax(c2(tanh(c1(h))), dim=1) -------------
        t = jnp.tanh(dot32(h.astype(bf16), c1w) + c1b)
        logits = dot32(t.astype(bf16), c2w) + c2b                   # (N, 2)
        e = jnp.exp(logits - jnp.max(logits, axis=1, keepdims=True))
        assign = e / jnp.sum(e, axis=1, keepdims=True)              # exact div
        s0, s1 = assign[:, 0:1], assign[:, 1:2]

        # ------ fold the cluster weights into the tiny (N, G) mask side ------
        masked_assign = jnp.concatenate([maskt * s0, maskt * s1], axis=1)
        ma_bf = masked_assign.astype(bf16)                          # (N, 2G)
        h_bf = h.astype(bf16)

        # pos embedding per graph: row 0 of S_g^T X_g == (mask_g * s0)^T @ h
        pos_emb = dot_t(ma_bf, h_bf)[:g, :]                         # (G, H)

        # graph embedding: mean over ALL nodes (reference semantics)
        gemb = jnp.broadcast_to(jnp.mean(h, axis=0, keepdims=True), (g, hidden))

        # ------ per-graph 2x2 new_adj = S_g^T A_g S_g  (two fused dots) ------
        v = dot_t(ma_bf, adj_bf)                                    # (2G, N)
        mask_rep = jnp.concatenate([mask_f, mask_f], axis=0)        # (2G, N)
        na = dot32((v * mask_rep).astype(bf16), assign.astype(bf16))  # (2G, 2)
        na00, na01 = na[:g, 0:1], na[:g, 1:2]
        na10, na11 = na[g:, 0:1], na[g:, 1:2]
        eps = 1e-5                     # F.normalize(p=1, dim=1, eps=1e-5) rows
        d0 = na00 / jnp.maximum(jnp.abs(na00) + jnp.abs(na01), eps)
        d1 = na11 / jnp.maximum(jnp.abs(na10) + jnp.abs(na11), eps)
        per_graph = 0.5 * ((d0 - 1.0) ** 2 + (d1 - 1.0) ** 2)       # MSE vs 1s
        pen = jnp.sum(per_graph, axis=0, keepdims=True) * (1.0 / g)  # (1, 1)

        # ---------------- power normalization (EUP rsqrt) --------------------
        def power_norm(z):
            ss = jnp.sum(jnp.sum(z * z, axis=1, keepdims=True),
                         axis=0, keepdims=True)
            msq = ss * (1.0 / (z.shape[0] * z.shape[1]))
            return z * jnp.where(msq > 1.0, lax.rsqrt(msq), 1.0)

        pos_emb = power_norm(pos_emb) + noise     # AWGN (zeros when snr == 0)
        gemb = power_norm(gemb)

        # ------ head: log_softmax(lin2(relu(lin1(z))));  dropout == id -------
        hh = jnp.maximum(dot32(pos_emb.astype(bf16), l1w) + l1b, 0.0)
        cls = dot32(hh.astype(bf16), l2w) + l2b
        cm = jnp.max(cls, axis=-1, keepdims=True)
        log_probs = cls - (jnp.log(jnp.sum(jnp.exp(cls - cm), axis=-1,
                                           keepdims=True)) + cm)

        # ----------- ONE lane-dense full-width store of all results ----------
        used = 2 * hidden + n_classes + 1
        parts = [pos_emb, gemb, log_probs, jnp.broadcast_to(pen, (g, 1))]
        if pack_w > used:
            parts.append(jnp.zeros((g, pack_w - used), f32))
        o_ref[...] = jnp.concatenate(parts, axis=1)

    return kernel


# ----------------------------------------------------------------------------
# Wrapper: single pallas_call for the whole forward
# ----------------------------------------------------------------------------
def gib_gcn_forward(x, a_norm, adj, mask, params, snr=0, noise_key=None):
    n, f_in = x.shape
    hidden = params["conv1_w"].shape[1]
    n_classes = params["lin2_w"].shape[1]
    g = mask.shape[0]
    n_extra = len(params["convs"])

    if snr:
        snr_lin = 10.0 ** (snr / 10.0)
        noise = (1.0 / np.sqrt(2.0 * snr_lin)) * jax.random.normal(
            noise_key, (g, hidden), jnp.float32)
    else:
        noise = jnp.zeros((g, hidden), jnp.float32)

    mask_np = np.asarray(mask, np.float32)

    # pack #1: everything with N-ish columns, bf16 (adjacencies, masks, x)
    gcols = max(n, f_in)
    gpack, g_offs = _pack_rows(
        [np.asarray(a_norm), np.asarray(adj), mask_np, mask_np.T, np.asarray(x)],
        gcols, 16, jnp.bfloat16)

    # pack #2: all MXU weights, bf16, `hidden` columns
    wcols = max(hidden, n_classes, 2)
    convs_w = ([np.concatenate([np.asarray(w) for w, _ in params["convs"]], 0)]
               if n_extra else [np.zeros((0, hidden), np.float32)])
    wpack, w_offs = _pack_rows(
        [np.asarray(params["conv1_w"])] + convs_w +
        [np.asarray(params["c1_w"]), np.asarray(params["lin1_w"]),
         np.asarray(params["c2_w"]), np.asarray(params["lin2_w"])],
        wcols, 16, jnp.bfloat16)

    # pack #3: biases + AWGN noise, f32
    convs_b = ([np.concatenate([np.asarray(b) for _, b in params["convs"]], 0)]
               if n_extra else [np.zeros((0, hidden), np.float32)])
    bnpack, b_offs = _pack_rows(
        [np.asarray(params["conv1_b"])] + convs_b +
        [np.asarray(params["c1_b"]), np.asarray(params["c2_b"]),
         np.asarray(params["lin1_b"]), np.asarray(params["lin2_b"]),
         np.asarray(noise)],
        wcols, 8, jnp.float32)

    used = 2 * hidden + n_classes + 1
    pack_w = max(128, _round_up(used, 128))

    flops = int(2 * n * f_in * hidden + (n_extra + 1) * 2 * n * n * hidden
                + n_extra * 2 * n * hidden * hidden
                + 2 * n * hidden * hidden + 4 * n * hidden
                + 2 * n * 2 * g * (hidden + n) + 8 * g * n
                + 2 * g * hidden * (hidden + n_classes))
    transcendentals = int(n * hidden + 2 * n + g * n_classes + 2)
    bytes_accessed = int(gpack.size * 2 + wpack.size * 2 + bnpack.size * 4
                         + g * pack_w * 4)

    kernel = make_fused_kernel(n, f_in, hidden, n_classes, g, n_extra, pack_w,
                               tuple(g_offs), tuple(w_offs), tuple(b_offs))
    packed = pl.pallas_call(
        kernel,
        out_shape=jax.ShapeDtypeStruct((g, pack_w), jnp.float32),
        in_specs=[VMEM_SPEC] * 3,
        out_specs=VMEM_SPEC,
        # 32 MiB scoped VMEM is safe on every generation (v7x physical VMEM is
        # only 64 MiB); raise towards 64-96 MiB only on v5e/v6e for larger N.
        compiler_params=pltpu.CompilerParams(vmem_limit_bytes=32 * 1024 * 1024),
        cost_estimate=pl.CostEstimate(flops=flops,
                                      transcendentals=transcendentals,
                                      bytes_accessed=bytes_accessed),
    )(gpack, wpack, bnpack)
    # TODO(synk): for large N, tile the (N,N) adjacency into (tm, N) row blocks
    #   (tm multiple of 256 on v6e/v7x, 128 on v5e) over a "parallel" grid axis
    #   with a VMEM accumulator so both v7x TensorCores are used and the working
    #   set fits v7x's 64 MiB VMEM; at this demo size everything fits whole-array.

    pos_emb = packed[:, 0:hidden]
    graph_emb = packed[:, hidden:2 * hidden]
    log_probs = packed[:, 2 * hidden:2 * hidden + n_classes]
    pos_penalty = packed[0:1, used - 1:used]
    return log_probs, pos_emb, graph_emb, pos_penalty


# ----------------------------------------------------------------------------
# Pure-JAX f32 reference (mirrors the PyTorch module, per-graph loop)
# ----------------------------------------------------------------------------
def reference_forward(x, a_norm, adj, batch, params, noise):
    h = a_norm @ (x @ params["conv1_w"]) + params["conv1_b"]
    for w, b in params["convs"]:
        h = a_norm @ (h @ w) + b
    assign = jax.nn.softmax(
        jnp.tanh(h @ params["c1_w"] + params["c1_b"]) @ params["c2_w"]
        + params["c2_b"], axis=1)
    batch = np.asarray(batch)
    g = int(batch.max()) + 1
    pos, gembs, pen = [], [], jnp.zeros(())
    for gi in range(g):
        idx = np.where(batch == gi)[0]
        st, end = int(idx[0]), int(idx[-1]) + 1
        s = assign[st:end]
        pos.append((s.T @ h[st:end])[0:1])
        new_adj = s.T @ adj[st:end, st:end] @ s
        row_l1 = jnp.sum(jnp.abs(new_adj), axis=1, keepdims=True)
        diag = jnp.diag(new_adj / jnp.maximum(row_l1, 1e-5))
        pen = pen + jnp.mean((diag - 1.0) ** 2)
        gembs.append(jnp.mean(h, axis=0, keepdims=True))
    pos = jnp.concatenate(pos, 0)
    gemb = jnp.concatenate(gembs, 0)
    pen = pen / g

    def pnorm(z):
        p = jnp.sqrt(jnp.mean(z * z))
        return jnp.where(p > 1.0, z / p, z)

    pos = pnorm(pos) + noise
    gemb = pnorm(gemb)
    hh = jax.nn.relu(pos @ params["lin1_w"] + params["lin1_b"])
    cls = hh @ params["lin2_w"] + params["lin2_b"]
    return jax.nn.log_softmax(cls, axis=-1), pos, gemb, pen.reshape(1, 1)


# ----------------------------------------------------------------------------
# Glue: parameter init, synthetic graph construction
# ----------------------------------------------------------------------------
def init_params(key, num_features, hidden, num_classes, num_layers):
    ks = jax.random.split(key, 16)
    s = 0.1
    params = {
        "conv1_w": s * jax.random.normal(ks[0], (num_features, hidden), jnp.float32),
        "conv1_b": s * jax.random.normal(ks[1], (1, hidden), jnp.float32),
        "convs": [],
        "lin1_w": s * jax.random.normal(ks[2], (hidden, hidden), jnp.float32),
        "lin1_b": s * jax.random.normal(ks[3], (1, hidden), jnp.float32),
        "lin2_w": s * jax.random.normal(ks[4], (hidden, num_classes), jnp.float32),
        "lin2_b": s * jax.random.normal(ks[5], (1, num_classes), jnp.float32),
        "c1_w": s * jax.random.normal(ks[6], (hidden, hidden), jnp.float32),
        "c1_b": s * jax.random.normal(ks[7], (1, hidden), jnp.float32),
        "c2_w": s * jax.random.normal(ks[8], (hidden, 2), jnp.float32),
        "c2_b": s * jax.random.normal(ks[9], (1, 2), jnp.float32),
    }
    for i in range(num_layers - 1):
        kw, kb = jax.random.split(ks[10 + i])
        params["convs"].append(
            (s * jax.random.normal(kw, (hidden, hidden), jnp.float32),
             s * jax.random.normal(kb, (1, hidden), jnp.float32)))
    return params


def build_graph(num_graphs, nodes_per_graph):
    """Ring graph inside each disjoint component; returns edge_index, batch."""
    src, dst = [], []
    for gi in range(num_graphs):
        base = gi * nodes_per_graph
        for i in range(nodes_per_graph):
            a, b = base + i, base + (i + 1) % nodes_per_graph
            src += [a, b]
            dst += [b, a]
    edge_index = np.stack([np.array(src), np.array(dst)], axis=0)
    batch = np.repeat(np.arange(num_graphs), nodes_per_graph)
    return edge_index, batch


def gcn_normalized_adj(edge_index, num_nodes):
    a = jnp.zeros((num_nodes, num_nodes), jnp.float32)
    a = a.at[edge_index[0], edge_index[1]].set(1.0)          # to_dense_adj
    a_hat = a + jnp.eye(num_nodes, dtype=jnp.float32)        # add self loops
    deg = jnp.sum(a_hat, axis=1)
    dinv = 1.0 / jnp.sqrt(deg)
    a_norm = dinv[:, None] * a_hat * dinv[None, :]
    return a, a_norm


if __name__ == "__main__":
    NUM_GRAPHS = 4
    NODES_PER_GRAPH = 8
    NUM_NODES = NUM_GRAPHS * NODES_PER_GRAPH          # 32
    NUM_FEATURES = 16
    HIDDEN = 32
    NUM_CLASSES = 4
    NUM_LAYERS = 3

    key = jax.random.PRNGKey(0)
    k_x, k_p = jax.random.split(key)

    edge_index, batch = build_graph(NUM_GRAPHS, NODES_PER_GRAPH)
    adj, a_norm = gcn_normalized_adj(edge_index, NUM_NODES)
    # one-hot segment mask (G, N): mask[g, n] = 1 if node n belongs to graph g
    mask = jnp.asarray(
        (batch[None, :] == np.arange(NUM_GRAPHS)[:, None]).astype(np.float32))

    x = jax.random.normal(k_x, (NUM_NODES, NUM_FEATURES), jnp.float32)
    params = init_params(k_p, NUM_FEATURES, HIDDEN, NUM_CLASSES, NUM_LAYERS)

    outs = gib_gcn_forward(x, a_norm, adj, mask, params, snr=0)
    jax.block_until_ready(outs)
    log_probs, pos_emb, graph_emb, pos_penalty = outs

    assert log_probs.shape == (NUM_GRAPHS, NUM_CLASSES)
    assert pos_emb.shape == (NUM_GRAPHS, HIDDEN)
    assert graph_emb.shape == (NUM_GRAPHS, HIDDEN)
    assert pos_penalty.shape == (1, 1)
    assert bool(jnp.all(jnp.isfinite(log_probs)))

    # f32 reference check (kernel runs bf16 MXU operands with f32 accumulation)
    ref = reference_forward(x, a_norm, adj, batch, params,
                            jnp.zeros((NUM_GRAPHS, HIDDEN), jnp.float32))
    for got, want in zip((log_probs, pos_emb, graph_emb, pos_penalty), ref):
        np.testing.assert_allclose(np.asarray(got), np.asarray(want),
                                   rtol=0.1, atol=0.06)

    print("KERNEL_OK")
</pallas_src>

<mosaic_0001>
module attributes {stable_mosaic.version = 11 : i64} {
  func.func @kernel(%arg0: memref<144x32xbf16, #tpu.memory_space<vmem>>, %arg1: memref<208x32xbf16, #tpu.memory_space<vmem>>, %arg2: memref<56x32xf32, #tpu.memory_space<vmem>>, %arg3: memref<4x128xf32, #tpu.memory_space<vmem>>) attributes {dimension_semantics = [], scalar_prefetch = 0 : i64, scratch_operands = 0 : i64, tpu.core_type = #tpu.core_type<tc>} {
    %c0 = arith.constant 0 : index
    %c0_0 = arith.constant 0 : index
    %0 = vector.load %arg0[%c0, %c0_0] : memref<144x32xbf16, #tpu.memory_space<vmem>>, vector<32x32xbf16>
    %c32 = arith.constant 32 : index
    %c0_1 = arith.constant 0 : index
    %1 = vector.load %arg0[%c32, %c0_1] : memref<144x32xbf16, #tpu.memory_space<vmem>>, vector<32x32xbf16>
    %c64 = arith.constant 64 : index
    %c0_2 = arith.constant 0 : index
    %2 = vector.load %arg0[%c64, %c0_2] : memref<144x32xbf16, #tpu.memory_space<vmem>>, vector<4x32xbf16>
    %3 = arith.extf %2 : vector<4x32xbf16> to vector<4x32xf32>
    %c80 = arith.constant 80 : index
    %c0_3 = arith.constant 0 : index
    %4 = vector.load %arg0[%c80, %c0_3] : memref<144x32xbf16, #tpu.memory_space<vmem>>, vector<32x4xbf16>
    %5 = arith.extf %4 : vector<32x4xbf16> to vector<32x4xf32>
    %c112 = arith.constant 112 : index
    %c0_4 = arith.constant 0 : index
    %6 = vector.load %arg0[%c112, %c0_4] : memref<144x32xbf16, #tpu.memory_space<vmem>>, vector<32x16xbf16>
    %c0_5 = arith.constant 0 : index
    %c0_6 = arith.constant 0 : index
    %7 = vector.load %arg1[%c0_5, %c0_6] : memref<208x32xbf16, #tpu.memory_space<vmem>>, vector<16x32xbf16>
    %c80_7 = arith.constant 80 : index
    %c0_8 = arith.constant 0 : index
    %8 = vector.load %arg1[%c80_7, %c0_8] : memref<208x32xbf16, #tpu.memory_space<vmem>>, vector<32x32xbf16>
    %c112_9 = arith.constant 112 : index
    %c0_10 = arith.constant 0 : index
    %9 = vector.load %arg1[%c112_9, %c0_10] : memref<208x32xbf16, #tpu.memory_space<vmem>>, vector<32x32xbf16>
    %c144 = arith.constant 144 : index
    %c0_11 = arith.constant 0 : index
    %10 = vector.load %arg1[%c144, %c0_11] : memref<208x32xbf16, #tpu.memory_space<vmem>>, vector<32x2xbf16>
    %c176 = arith.constant 176 : index
    %c0_12 = arith.constant 0 : index
    %11 = vector.load %arg1[%c176, %c0_12] : memref<208x32xbf16, #tpu.memory_space<vmem>>, vector<32x4xbf16>
    %c0_13 = arith.constant 0 : index
    %c0_14 = arith.constant 0 : index
    %12 = vector.load %arg2[%c0_13, %c0_14] : memref<56x32xf32, #tpu.memory_space<vmem>>, vector<1x32xf32>
    %c16 = arith.constant 16 : index
    %c0_15 = arith.constant 0 : index
    %13 = vector.load %arg2[%c16, %c0_15] : memref<56x32xf32, #tpu.memory_space<vmem>>, vector<1x32xf32>
    %c24 = arith.constant 24 : index
    %c0_16 = arith.constant 0 : index
    %14 = vector.load %arg2[%c24, %c0_16] : memref<56x32xf32, #tpu.memory_space<vmem>>, vector<1x2xf32>
    %c32_17 = arith.constant 32 : index
    %c0_18 = arith.constant 0 : index
    %15 = vector.load %arg2[%c32_17, %c0_18] : memref<56x32xf32, #tpu.memory_space<vmem>>, vector<1x32xf32>
    %c40 = arith.constant 40 : index
    %c0_19 = arith.constant 0 : index
    %16 = vector.load %arg2[%c40, %c0_19] : memref<56x32xf32, #tpu.memory_space<vmem>>, vector<1x4xf32>
    %c48 = arith.constant 48 : index
    %c0_20 = arith.constant 0 : index
    %17 = vector.load %arg2[%c48, %c0_20] : memref<56x32xf32, #tpu.memory_space<vmem>>, vector<4x32xf32>
    %cst = arith.constant dense<0.000000e+00> : vector<32x32xf32>
    %18 = tpu.matmul %6, %7, %cst {dimension_numbers = #tpu.dot_dimension_numbers<[1], [0], [0], [1], [0, 0, 1, 1], [], []>} : vector<32x16xbf16>, vector<16x32xbf16>, vector<32x32xf32> -> vector<32x32xf32>
    %19 = arith.truncf %18 : vector<32x32xf32> to vector<32x32xbf16>
    %cst_21 = arith.constant dense<0.000000e+00> : vector<32x32xf32>
    %20 = tpu.matmul %0, %19, %cst_21 {dimension_numbers = #tpu.dot_dimension_numbers<[1], [0], [0], [1], [0, 0, 1, 1], [], []>} : vector<32x32xbf16>, vector<32x32xbf16>, vector<32x32xf32> -> vector<32x32xf32>
    %21 = vector.broadcast %12 : vector<1x32xf32> to vector<32x32xf32>
    %22 = arith.addf %20, %21 : vector<32x32xf32>
    %c16_22 = arith.constant 16 : index
    %c0_23 = arith.constant 0 : index
    %23 = vector.load %arg1[%c16_22, %c0_23] : memref<208x32xbf16, #tpu.memory_space<vmem>>, vector<32x32xbf16>
    %c8 = arith.constant 8 : index
    %c0_24 = arith.constant 0 : index
    %24 = vector.load %arg2[%c8, %c0_24] : memref<56x32xf32, #tpu.memory_space<vmem>>, vector<1x32xf32>
    %25 = arith.truncf %22 : vector<32x32xf32> to vector<32x32xbf16>
    %cst_25 = arith.constant dense<0.000000e+00> : vector<32x32xf32>
    %26 = tpu.matmul %25, %23, %cst_25 {dimension_numbers = #tpu.dot_dimension_numbers<[1], [0], [0], [1], [0, 0, 1, 1], [], []>} : vector<32x32xbf16>, vector<32x32xbf16>, vector<32x32xf32> -> vector<32x32xf32>
    %27 = arith.truncf %26 : vector<32x32xf32> to vector<32x32xbf16>
    %cst_26 = arith.constant dense<0.000000e+00> : vector<32x32xf32>
    %28 = tpu.matmul %0, %27, %cst_26 {dimension_numbers = #tpu.dot_dimension_numbers<[1], [0], [0], [1], [0, 0, 1, 1], [], []>} : vector<32x32xbf16>, vector<32x32xbf16>, vector<32x32xf32> -> vector<32x32xf32>
    %29 = vector.broadcast %24 : vector<1x32xf32> to vector<32x32xf32>
    %30 = arith.addf %28, %29 : vector<32x32xf32>
    %c48_27 = arith.constant 48 : index
    %c0_28 = arith.constant 0 : index
    %31 = vector.load %arg1[%c48_27, %c0_28] : memref<208x32xbf16, #tpu.memory_space<vmem>>, vector<32x32xbf16>
    %c9 = arith.constant 9 : index
    %c0_29 = arith.constant 0 : index
    %32 = vector.load %arg2[%c9, %c0_29] : memref<56x32xf32, #tpu.memory_space<vmem>>, vector<1x32xf32>
    %33 = arith.truncf %30 : vector<32x32xf32> to vector<32x32xbf16>
    %cst_30 = arith.constant dense<0.000000e+00> : vector<32x32xf32>
    %34 = tpu.matmul %33, %31, %cst_30 {dimension_numbers = #tpu.dot_dimension_numbers<[1], [0], [0], [1], [0, 0, 1, 1], [], []>} : vector<32x32xbf16>, vector<32x32xbf16>, vector<32x32xf32> -> vector<32x32xf32>
    %35 = arith.truncf %34 : vector<32x32xf32> to vector<32x32xbf16>
    %cst_31 = arith.constant dense<0.000000e+00> : vector<32x32xf32>
    %36 = tpu.matmul %0, %35, %cst_31 {dimension_numbers = #tpu.dot_dimension_numbers<[1], [0], [0], [1], [0, 0, 1, 1], [], []>} : vector<32x32xbf16>, vector<32x32xbf16>, vector<32x32xf32> -> vector<32x32xf32>
    %37 = vector.broadcast %32 : vector<1x32xf32> to vector<32x32xf32>
    %38 = arith.addf %36, %37 : vector<32x32xf32>
    %39 = arith.truncf %38 : vector<32x32xf32> to vector<32x32xbf16>
    %cst_32 = arith.constant dense<0.000000e+00> : vector<32x32xf32>
    %40 = tpu.matmul %39, %8, %cst_32 {dimension_numbers = #tpu.dot_dimension_numbers<[1], [0], [0], [1], [0, 0, 1, 1], [], []>} : vector<32x32xbf16>, vector<32x32xbf16>, vector<32x32xf32> -> vector<32x32xf32>
    %41 = vector.broadcast %13 : vector<1x32xf32> to vector<32x32xf32>
    %42 = arith.addf %40, %41 : vector<32x32xf32>
    %43 = math.tanh %42 : vector<32x32xf32>
    %44 = arith.truncf %43 : vector<32x32xf32> to vector<32x32xbf16>
    %cst_33 = arith.constant dense<0.000000e+00> : vector<32x2xf32>
    %45 = tpu.matmul %44, %10, %cst_33 {dimension_numbers = #tpu.dot_dimension_numbers<[1], [0], [0], [1], [0, 0, 1, 1], [], []>} : vector<32x32xbf16>, vector<32x2xbf16>, vector<32x2xf32> -> vector<32x2xf32>
    %46 = vector.broadcast %14 : vector<1x2xf32> to vector<32x2xf32>
    %47 = arith.addf %45, %46 : vector<32x2xf32>
    %cst_34 = arith.constant dense<0xFF800000> : vector<32xf32>
    %48 = vector.multi_reduction <maximumf>, %47, %cst_34 [1] : vector<32x2xf32> to vector<32xf32>
    %49 = vector.shape_cast %48 : vector<32xf32> to vector<32x1xf32>
    %50 = vector.broadcast %49 : vector<32x1xf32> to vector<32x2xf32>
    %51 = arith.subf %47, %50 : vector<32x2xf32>
    %52 = math.exp %51 : vector<32x2xf32>
    %cst_35 = arith.constant dense<0.000000e+00> : vector<32xf32>
    %53 = vector.multi_reduction <add>, %52, %cst_35 [1] : vector<32x2xf32> to vector<32xf32>
    %54 = vector.shape_cast %53 : vector<32xf32> to vector<32x1xf32>
    %55 = vector.broadcast %54 : vector<32x1xf32> to vector<32x2xf32>
    %56 = arith.divf %52, %55 : vector<32x2xf32>
    %57 = vector.extract_strided_slice %56 {offsets = [0, 0], sizes = [32, 1], strides = [1, 1]} : vector<32x2xf32> to vector<32x1xf32>
    %58 = vector.extract_strided_slice %56 {offsets = [0, 1], sizes = [32, 1], strides = [1, 1]} : vector<32x2xf32> to vector<32x1xf32>
    %59 = vector.broadcast %57 : vector<32x1xf32> to vector<32x4xf32>
    %60 = arith.mulf %5, %59 : vector<32x4xf32>
    %61 = vector.broadcast %58 : vector<32x1xf32> to vector<32x4xf32>
    %62 = arith.mulf %5, %61 : vector<32x4xf32>
    %63 = tpu.concatenate %60, %62 in 1 : vector<32x4xf32>, vector<32x4xf32> -> vector<32x8xf32>
    %64 = arith.truncf %63 : vector<32x8xf32> to vector<32x8xbf16>
    %65 = arith.truncf %38 : vector<32x32xf32> to vector<32x32xbf16>
    %cst_36 = arith.constant dense<0.000000e+00> : vector<8x32xf32>
    %66 = tpu.matmul %64, %65, %cst_36 {dimension_numbers = #tpu.dot_dimension_numbers<[0], [0], [1], [1], [0, 1, 1, 1], [], []>} : vector<32x8xbf16>, vector<32x32xbf16>, vector<8x32xf32> -> vector<8x32xf32>
    %67 = vector.extract_strided_slice %66 {offsets = [0, 0], sizes = [4, 32], strides = [1, 1]} : vector<8x32xf32> to vector<4x32xf32>
    %cst_37 = arith.constant dense<0.000000e+00> : vector<32xf32>
    %68 = vector.multi_reduction <add>, %38, %cst_37 [0] : vector<32x32xf32> to vector<32xf32>
    %69 = vector.shape_cast %68 : vector<32xf32> to vector<1x32xf32>
    %cst_38 = arith.constant 3.200000e+01 : f32
    %70 = vector.broadcast %cst_38 : f32 to vector<1x32xf32>
    %71 = arith.divf %69, %70 : vector<1x32xf32>
    %72 = vector.shape_cast %71 : vector<1x32xf32> to vector<1x32xf32>
    %73 = vector.broadcast %72 : vector<1x32xf32> to vector<4x32xf32>
    %cst_39 = arith.constant dense<0.000000e+00> : vector<8x32xf32>
    %74 = tpu.matmul %64, %1, %cst_39 {dimension_numbers = #tpu.dot_dimension_numbers<[0], [0], [1], [1], [0, 1, 1, 1], [], []>} : vector<32x8xbf16>, vector<32x32xbf16>, vector<8x32xf32> -> vector<8x32xf32>
    %75 = tpu.concatenate %3, %3 in 0 : vector<4x32xf32>, vector<4x32xf32> -> vector<8x32xf32>
    %76 = arith.mulf %74, %75 : vector<8x32xf32>
    %77 = arith.truncf %76 : vector<8x32xf32> to vector<8x32xbf16>
    %78 = arith.truncf %56 : vector<32x2xf32> to vector<32x2xbf16>
    %cst_40 = arith.constant dense<0.000000e+00> : vector<8x2xf32>
    %79 = tpu.matmul %77, %78, %cst_40 {dimension_numbers = #tpu.dot_dimension_numbers<[1], [0], [0], [1], [0, 0, 1, 1], [], []>} : vector<8x32xbf16>, vector<32x2xbf16>, vector<8x2xf32> -> vector<8x2xf32>
    %80 = vector.extract_strided_slice %79 {offsets = [0, 0], sizes = [4, 1], strides = [1, 1]} : vector<8x2xf32> to vector<4x1xf32>
    %81 = vector.extract_strided_slice %79 {offsets = [0, 1], sizes = [4, 1], strides = [1, 1]} : vector<8x2xf32> to vector<4x1xf32>
    %82 = vector.extract_strided_slice %79 {offsets = [4, 0], sizes = [4, 1], strides = [1, 1]} : vector<8x2xf32> to vector<4x1xf32>
    %83 = vector.extract_strided_slice %79 {offsets = [4, 1], sizes = [4, 1], strides = [1, 1]} : vector<8x2xf32> to vector<4x1xf32>
    %84 = math.absf %80 : vector<4x1xf32>
    %85 = math.absf %81 : vector<4x1xf32>
    %86 = arith.addf %84, %85 : vector<4x1xf32>
    %cst_41 = arith.constant 9.99999974E-6 : f32
    %87 = vector.broadcast %cst_41 : f32 to vector<4x1xf32>
    %88 = arith.maximumf %86, %87 : vector<4x1xf32>
    %89 = arith.divf %80, %88 : vector<4x1xf32>
    %90 = math.absf %82 : vector<4x1xf32>
    %91 = math.absf %83 : vector<4x1xf32>
    %92 = arith.addf %90, %91 : vector<4x1xf32>
    %cst_42 = arith.constant 9.99999974E-6 : f32
    %93 = vector.broadcast %cst_42 : f32 to vector<4x1xf32>
    %94 = arith.maximumf %92, %93 : vector<4x1xf32>
    %95 = arith.divf %83, %94 : vector<4x1xf32>
    %cst_43 = arith.constant 1.000000e+00 : f32
    %96 = vector.broadcast %cst_43 : f32 to vector<4x1xf32>
    %97 = arith.subf %89, %96 : vector<4x1xf32>
    %98 = arith.mulf %97, %97 : vector<4x1xf32>
    %cst_44 = arith.constant 1.000000e+00 : f32
    %99 = vector.broadcast %cst_44 : f32 to vector<4x1xf32>
    %100 = arith.subf %95, %99 : vector<4x1xf32>
    %101 = arith.mulf %100, %100 : vector<4x1xf32>
    %102 = arith.addf %98, %101 : vector<4x1xf32>
    %cst_45 = arith.constant 5.000000e-01 : f32
    %103 = vector.broadcast %cst_45 : f32 to vector<4x1xf32>
    %104 = arith.mulf %103, %102 : vector<4x1xf32>
    %cst_46 = arith.constant dense<0.000000e+00> : vector<1xf32>
    %105 = vector.multi_reduction <add>, %104, %cst_46 [0] : vector<4x1xf32> to vector<1xf32>
    %106 = vector.shape_cast %105 : vector<1xf32> to vector<1x1xf32>
    %cst_47 = arith.constant 2.500000e-01 : f32
    %107 = vector.broadcast %cst_47 : f32 to vector<1x1xf32>
    %108 = arith.mulf %106, %107 : vector<1x1xf32>
    %109 = arith.mulf %67, %67 : vector<4x32xf32>
    %cst_48 = arith.constant dense<0.000000e+00> : vector<4xf32>
    %110 = vector.multi_reduction <add>, %109, %cst_48 [1] : vector<4x32xf32> to vector<4xf32>
    %111 = vector.shape_cast %110 : vector<4xf32> to vector<4x1xf32>
    %cst_49 = arith.constant dense<0.000000e+00> : vector<1xf32>
    %112 = vector.multi_reduction <add>, %111, %cst_49 [0] : vector<4x1xf32> to vector<1xf32>
    %113 = vector.shape_cast %112 : vector<1xf32> to vector<1x1xf32>
    %cst_50 = arith.constant 7.812500e-03 : f32
    %114 = vector.broadcast %cst_50 : f32 to vector<1x1xf32>
    %115 = arith.mulf %113, %114 : vector<1x1xf32>
    %cst_51 = arith.constant 1.000000e+00 : f32
    %116 = vector.broadcast %cst_51 : f32 to vector<1x1xf32>
    %117 = arith.cmpf ogt, %115, %116 : vector<1x1xf32>
    %118 = math.rsqrt %115 : vector<1x1xf32>
    %cst_52 = arith.constant 1.000000e+00 : f32
    %119 = vector.broadcast %cst_52 : f32 to vector<1x1xf32>
    %120 = arith.select %117, %118, %119 : vector<1x1xi1>, vector<1x1xf32>
    %121 = vector.broadcast %120 : vector<1x1xf32> to vector<4x32xf32>
    %122 = arith.mulf %67, %121 : vector<4x32xf32>
    %123 = arith.addf %122, %17 : vector<4x32xf32>
    %124 = arith.mulf %73, %73 : vector<4x32xf32>
    %cst_53 = arith.constant dense<0.000000e+00> : vector<4xf32>
    %125 = vector.multi_reduction <add>, %124, %cst_53 [1] : vector<4x32xf32> to vector<4xf32>
    %126 = vector.shape_cast %125 : vector<4xf32> to vector<4x1xf32>
    %cst_54 = arith.constant dense<0.000000e+00> : vector<1xf32>
    %127 = vector.multi_reduction <add>, %126, %cst_54 [0] : vector<4x1xf32> to vector<1xf32>
    %128 = vector.shape_cast %127 : vector<1xf32> to vector<1x1xf32>
    %cst_55 = arith.constant 7.812500e-03 : f32
    %129 = vector.broadcast %cst_55 : f32 to vector<1x1xf32>
    %130 = arith.mulf %128, %129 : vector<1x1xf32>
    %cst_56 = arith.constant 1.000000e+00 : f32
    %131 = vector.broadcast %cst_56 : f32 to vector<1x1xf32>
    %132 = arith.cmpf ogt, %130, %131 : vector<1x1xf32>
    %133 = math.rsqrt %130 : vector<1x1xf32>
    %cst_57 = arith.constant 1.000000e+00 : f32
    %134 = vector.broadcast %cst_57 : f32 to vector<1x1xf32>
    %135 = arith.select %132, %133, %134 : vector<1x1xi1>, vector<1x1xf32>
    %136 = vector.broadcast %135 : vector<1x1xf32> to vector<4x32xf32>
    %137 = arith.mulf %73, %136 : vector<4x32xf32>
    %138 = arith.truncf %123 : vector<4x32xf32> to vector<4x32xbf16>
    %cst_58 = arith.constant dense<0.000000e+00> : vector<4x32xf32>
    %139 = tpu.matmul %138, %9, %cst_58 {dimension_numbers = #tpu.dot_dimension_numbers<[1], [0], [0], [1], [0, 0, 1, 1], [], []>} : vector<4x32xbf16>, vector<32x32xbf16>, vector<4x32xf32> -> vector<4x32xf32>
    %140 = vector.broadcast %15 : vector<1x32xf32> to vector<4x32xf32>
    %141 = arith.addf %139, %140 : vector<4x32xf32>
    %cst_59 = arith.constant 0.000000e+00 : f32
    %142 = vector.broadcast %cst_59 : f32 to vector<4x32xf32>
    %143 = arith.maximumf %141, %142 : vector<4x32xf32>
    %144 = arith.truncf %143 : vector<4x32xf32> to vector<4x32xbf16>
    %cst_60 = arith.constant dense<0.000000e+00> : vector<4x4xf32>
    %145 = tpu.matmul %144, %11, %cst_60 {dimension_numbers = #tpu.dot_dimension_numbers<[1], [0], [0], [1], [0, 0, 1, 1], [], []>} : vector<4x32xbf16>, vector<32x4xbf16>, vector<4x4xf32> -> vector<4x4xf32>
    %146 = vector.broadcast %16 : vector<1x4xf32> to vector<4x4xf32>
    %147 = arith.addf %145, %146 : vector<4x4xf32>
    %cst_61 = arith.constant dense<0xFF800000> : vector<4xf32>
    %148 = vector.multi_reduction <maximumf>, %147, %cst_61 [1] : vector<4x4xf32> to vector<4xf32>
    %149 = vector.shape_cast %148 : vector<4xf32> to vector<4x1xf32>
    %150 = vector.broadcast %149 : vector<4x1xf32> to vector<4x4xf32>
    %151 = arith.subf %147, %150 : vector<4x4xf32>
    %152 = math.exp %151 : vector<4x4xf32>
    %cst_62 = arith.constant dense<0.000000e+00> : vector<4xf32>
    %153 = vector.multi_reduction <add>, %152, %cst_62 [1] : vector<4x4xf32> to vector<4xf32>
    %154 = vector.shape_cast %153 : vector<4xf32> to vector<4x1xf32>
    %155 = math.log %154 : vector<4x1xf32>
    %156 = arith.addf %155, %149 : vector<4x1xf32>
    %157 = vector.broadcast %156 : vector<4x1xf32> to vector<4x4xf32>
    %158 = arith.subf %147, %157 : vector<4x4xf32>
    %159 = vector.shape_cast %108 : vector<1x1xf32> to vector<1x1xf32>
    %160 = vector.broadcast %159 : vector<1x1xf32> to vector<4x1xf32>
    %cst_63 = arith.constant 0.000000e+00 : f32
    %161 = vector.broadcast %cst_63 : f32 to vector<4x59xf32>
    %162 = tpu.concatenate %123, %137, %158, %160, %161 in 1 : vector<4x32xf32>, vector<4x32xf32>, vector<4x4xf32>, vector<4x1xf32>, vector<4x59xf32> -> vector<4x128xf32>
    %c0_64 = arith.constant 0 : index
    %c0_65 = arith.constant 0 : index
    %163 = vector.load %arg3[%c0_64, %c0_65] : memref<4x128xf32, #tpu.memory_space<vmem>>, vector<4x128xf32>
    tpu.vector_store %arg3[%c0_64, %c0_65], %162 {strides = array<i32>} : memref<4x128xf32, #tpu.memory_space<vmem>>, vector<4x128xf32>,
    return
  }
}

</mosaic_0001>

<llo_original>
// kernel: tpu_custom_call.1
$region0: #{tpu_custom_call.1}
  #allocation0 [shape = 'u32[]', space=smem, size = 0x4, offset = 0x4, fixed_abs, tag = 'smem constant byte address 0x4 - core index']
  #allocation1 [shape = 'u32[144,128]{1,0:T(1,128)}', space=vmem, size = 0x12000, scoped, tag = 'internal scratch']
  %s0 = inlined_call_operand.vmem [shape: bf16[144,32], index: 0, kind: input, shape index: {}]
  %s1 = inlined_call_operand.vmem [shape: bf16[208,32], index: 1, kind: input, shape index: {}]
  %s2 = inlined_call_operand.vmem [shape: f32[56,32], index: 2, kind: input, shape index: {}]
  %s3 = inlined_call_operand.hbm [shape: f32[4,128], index: 3, kind: output, shape index: {}]
  %s4 = sld [smem:[#allocation0]]
  $region22: #{tpu_custom_call.1} parent=0
    _
  %s6 = ssub.s32 1, %s4
  %s7 = scalar_select 0, %s6, %s4
  $region1: #{tpu_custom_call.1} parent=0
    #allocation2 [shape = 'u8[2048]{0}', space=vmem, size = 0x800, scoped, tag = 'output window, operand 0, single buffered']
    #allocation3 [shape = 's32[1]{0}', space=sflag, size = 0x4, scoped, tag = 'scoped memory for tpu_custom_call.1']
    %8 = vsyncpa [#allocation3], 0
    // Predicated region
    $region2: #{tpu_custom_call.1} parent=1 // pred_check
      _
    $region3: #{tpu_custom_call.1} parent=1 // pred_check_branch
      %10 = sbr.rel (0) target = $region5
    $region4: #{tpu_custom_call.1} parent=1 // pred_region
      _
    $region5: #{tpu_custom_call.1} parent=1 // pred_fallthru
      _
    // Predicated region
    $region6: #{tpu_custom_call.1} parent=1 // pred_check
      _
    $region7: #{tpu_custom_call.1} parent=1 // pred_check_branch
      %12 = sbr.rel (0) target = $region9
    $region8: #{tpu_custom_call.1} parent=1 // pred_region
      _
    $region9: #{tpu_custom_call.1} parent=1 // pred_fallthru
      _
    // Predicated region
    $region10: #{tpu_custom_call.1} parent=1 // pred_check
      _
    $region11: #{tpu_custom_call.1} parent=1 // pred_check_branch
      %14 = sbr.rel (0) target = $region13
    $region12: #{tpu_custom_call.1} parent=1 // pred_region
      _
    $region13: #{tpu_custom_call.1} parent=1 // pred_fallthru
      _
    %v16 = vld [vmem:[%s0] sm:$0xf]
    %v17 = vld [vmem:[%s0 + $0x4] sm:$0xf]
    %v18 = vld [vmem:[%s0 + $0x8] sm:$0xf]
    %v19 = vld [vmem:[%s0 + $0xc] sm:$0xf]
    %v20 = vld [vmem:[%s0 + $0x10] sm:$0xf]
    %v21 = vld [vmem:[%s0 + $0x14] sm:$0xf]
    %v22 = vld [vmem:[%s0 + $0x18] sm:$0xf]
    %v23 = vld [vmem:[%s0 + $0x1c] sm:$0xf]
    %v24 = vld [vmem:[%s0 + $0x20] sm:$0x3]
    %v25 = vunpack.c.l.bf16 %v24
    %v26 = vld [vmem:[%s0 + $0x28] sm:$0xf]
    %v27 = vld [vmem:[%s0 + $0x2c] sm:$0xf]
    %v28 = vld [vmem:[%s0 + $0x30] sm:$0xf]
    %v29 = vld [vmem:[%s0 + $0x34] sm:$0xf]
    %v30 = vunpack.c.l.bf16 %v26
    %v31 = vunpack.c.l.bf16 %v27
    %v32 = vunpack.c.l.bf16 %v28
    %v33 = vunpack.c.l.bf16 %v29
    %v34 = vld [vmem:[%s0 + $0x38] sm:$0xf]
    %v35 = vld [vmem:[%s0 + $0x3c] sm:$0xf]
    %v36 = vld [vmem:[%s0 + $0x40] sm:$0xf]
    %v37 = vld [vmem:[%s0 + $0x44] sm:$0xf]
    %v38 = vld [vmem:[%s1] sm:$0xf]
    %v39 = vld [vmem:[%s1 + $0x4] sm:$0xf]
    %v40 = vld [vmem:[%s1 + $0x28] sm:$0xf]
    %v41 = vld [vmem:[%s1 + $0x2c] sm:$0xf]
    %v42 = vld [vmem:[%s1 + $0x30] sm:$0xf]
    %v43 = vld [vmem:[%s1 + $0x34] sm:$0xf]
    %v44 = vld [vmem:[%s1 + $0x38] sm:$0xf]
    %v45 = vld [vmem:[%s1 + $0x3c] sm:$0xf]
    %v46 = vld [vmem:[%s1 + $0x40] sm:$0xf]
    %v47 = vld [vmem:[%s1 + $0x44] sm:$0xf]
    %v48 = vld [vmem:[%s1 + $0x48] sm:$0xf]
    %v49 = vld [vmem:[%s1 + $0x4c] sm:$0xf]
    %v50 = vld [vmem:[%s1 + $0x50] sm:$0xf]
    %v51 = vld [vmem:[%s1 + $0x54] sm:$0xf]
    %v52 = vld [vmem:[%s1 + $0x58] sm:$0xf]
    %v53 = vld [vmem:[%s1 + $0x5c] sm:$0xf]
    %v54 = vld [vmem:[%s1 + $0x60] sm:$0xf]
    %v55 = vld [vmem:[%s1 + $0x64] sm:$0xf]
    %v56 = vld [vmem:[%s2] sm:$0x1]
    %v57 = vld [vmem:[%s2 + $0x10] sm:$0x1]
    %v58 = vld [vmem:[%s2 + $0x18] sm:$0x1]
    %v59 = vld [vmem:[%s2 + $0x20] sm:$0x1]
    %v60 = vld [vmem:[%s2 + $0x28] sm:$0x1]
    %v61 = vld [vmem:[%s2 + $0x30] sm:$0xf]
    %v66 = vunpack.c.l.b16 %v34
    %v67 = vunpack.c.l.b16 %v35
    %v68 = vunpack.c.l.b16 %v36
    %v69 = vunpack.c.l.b16 %v37
    %v70 = vpack.c.b16 %v67, %v66
    %v71 = vpack.c.b16 %v69, %v68
    %v74 = vunpack.c.l.b16 %v38
    %v75 = vunpack.c.l.b16 %v39
    %v76 = vpack.c.b16 %v75, %v74
    %vm78 = vcmask 130048
    %v80 = vsel %vm78, %v70, 0
    %v83 = vsel %vm78, %v71, 0
    %85 = vmatprep.subr.bf16.mxu0 0
    %86 = vmatpush1.bf16.msra.mxu0 %v76
    %87 = vmatprep.subr.bf16.mxu0 0
    %88 = vmatpush1.bf16.msra.mxu0 0
    %89 = vmatprep.subr.bf16.mxu0 0
    %90 = vmatpush1.bf16.msra.mxu0 0
    %91 = vmatprep.subr.bf16.mxu0 0
    %92 = vmatpush1.bf16.msra.mxu0 0
    %93 = vmatprep.subr.bf16.mxu0 0
    %94 = vmatpush1.bf16.msra.mxu0 0
    %95 = vmatprep.subr.bf16.mxu0 0
    %96 = vmatpush1.bf16.msra.mxu0 0
    %97 = vmatprep.subr.bf16.mxu0 0
    %98 = vmatpush1.bf16.msra.mxu0 0
    %99 = vmatprep.subr.bf16.mxu0 0
    %100 = vmatpush1.bf16.msra.mxu0 0
    %101 = vmatprep.subr.bf16.mxu0 0
    %102 = vmatpush1.bf16.msra.mxu0 0
    %103 = vmatprep.subr.bf16.mxu0 0
    %104 = vmatpush1.bf16.msra.mxu0 0
    %105 = vmatprep.subr.bf16.mxu0 0
    %106 = vmatpush1.bf16.msra.mxu0 0
    %107 = vmatprep.subr.bf16.mxu0 0
    %108 = vmatpush1.bf16.msra.mxu0 0
    %109 = vmatprep.subr.bf16.mxu0 0
    %110 = vmatpush1.bf16.msra.mxu0 0
    %111 = vmatprep.subr.bf16.mxu0 0
    %112 = vmatpush1.bf16.msra.mxu0 0
    %113 = vmatprep.subr.bf16.mxu0 0
    %114 = vmatpush1.bf16.msra.mxu0 0
    %115 = vmatprep.subr.bf16.mxu0 0
    %116 = vmatpush1.bf16.msra.mxu0 0
    %117 = vmatprep.mubr.bf16.mxu0 0
    %118 = vmatmul.mubr.bf16.gmra.mrb[0].mxu0 %v80
    %v119 = vpop.f32.mrb[0].mxu0
    %v120 = vadd.f32 0.0, %v119
    %v121 = vpop.f32.mrb[0].mxu0
    %v122 = vpop.f32.mrb[0].mxu0
    %v123 = vadd.f32 0.0, %v122
    %v124 = vpop.f32.mrb[0].mxu0
    %125 = vmatprep.mubr.bf16.mxu0 0
    %126 = vmatmul.mubr.bf16.gmra.mrb[0].mxu0 %v83
    %v127 = vpop.f32.mrb[0].mxu0
    %v128 = vadd.f32 0.0, %v127
    %v129 = vpop.f32.mrb[0].mxu0
    %v130 = vpop.f32.mrb[0].mxu0
    %v131 = vadd.f32 0.0, %v130
    %v132 = vpop.f32.mrb[0].mxu0
    %133 = vdwg.mxu0
    %v134 = vpack.c.bf16 %v123, %v120
    %v135 = vpack.c.bf16 %v131, %v128
    %v136 = vlaneseq
    %v137 = vshrl.u32 %v136, 7
    %v138 = vsub.s32 0, %v137
    %v139 = vrot.slane %v56, %v138
    %v144 = vunpack.c.l.b16 %v16
    %v145 = vunpack.c.l.b16 %v17
    %v146 = vunpack.c.l.b16 %v18
    %v147 = vunpack.c.l.b16 %v19
    %v148 = vpack.c.b16 %v145, %v144
    %v149 = vpack.c.b16 %v147, %v146
    %vm150 = vcmask 261120
    %v152 = vsel %vm150, %v148, 0
    %v155 = vsel %vm150, %v149, 0
    %157 = vmatprep.subr.bf16.mxu0 0
    %158 = vmatpush1.bf16.msra.mxu0 %v134
    %159 = vmatprep.subr.bf16.mxu0 0
    %160 = vmatpush1.bf16.msra.mxu0 %v135
    %161 = vmatprep.subr.bf16.mxu0 0
    %162 = vmatpush1.bf16.msra.mxu0 0
    %163 = vmatprep.subr.bf16.mxu0 0
    %164 = vmatpush1.bf16.msra.mxu0 0
    %165 = vmatprep.subr.bf16.mxu0 0
    %166 = vmatpush1.bf16.msra.mxu0 0
    %167 = vmatprep.subr.bf16.mxu0 0
    %168 = vmatpush1.bf16.msra.mxu0 0
    %169 = vmatprep.subr.bf16.mxu0 0
    %170 = vmatpush1.bf16.msra.mxu0 0
    %171 = vmatprep.subr.bf16.mxu0 0
    %172 = vmatpush1.bf16.msra.mxu0 0
    %173 = vmatprep.subr.bf16.mxu0 0
    %174 = vmatpush1.bf16.msra.mxu0 0
    %175 = vmatprep.subr.bf16.mxu0 0
    %176 = vmatpush1.bf16.msra.mxu0 0
    %177 = vmatprep.subr.bf16.mxu0 0
    %178 = vmatpush1.bf16.msra.mxu0 0
    %179 = vmatprep.subr.bf16.mxu0 0
    %180 = vmatpush1.bf16.msra.mxu0 0
    %181 = vmatprep.subr.bf16.mxu0 0
    %182 = vmatpush1.bf16.msra.mxu0 0
    %183 = vmatprep.subr.bf16.mxu0 0
    %184 = vmatpush1.bf16.msra.mxu0 0
    %185 = vmatprep.subr.bf16.mxu0 0
    %186 = vmatpush1.bf16.msra.mxu0 0
    %187 = vmatprep.subr.bf16.mxu0 0
    %188 = vmatpush1.bf16.msra.mxu0 0
    %189 = vmatprep.mubr.bf16.mxu0 0
    %190 = vmatmul.mubr.bf16.gmra.mrb[0].mxu0 %v152
    %v191 = vpop.f32.mrb[0].mxu0
    %v192 = vadd.f32 %v139, %v191
    %v193 = vpop.f32.mrb[0].mxu0
    %v194 = vpop.f32.mrb[0].mxu0
    %v195 = vadd.f32 %v139, %v194
    %v196 = vpop.f32.mrb[0].mxu0
    %197 = vmatprep.mubr.bf16.mxu0 0
    %198 = vmatmul.mubr.bf16.gmra.mrb[0].mxu0 %v155
    %v199 = vpop.f32.mrb[0].mxu0
    %v200 = vadd.f32 %v139, %v199
    %v201 = vpop.f32.mrb[0].mxu0
    %v202 = vpop.f32.mrb[0].mxu0
    %v203 = vadd.f32 %v139, %v202
    %v204 = vpop.f32.mrb[0].mxu0
    %205 = vdwg.mxu0
    %v206 = vld [vmem:[%s1 + $0x8] sm:$0xf]
    %v207 = vld [vmem:[%s1 + $0xc] sm:$0xf]
    %v208 = vld [vmem:[%s1 + $0x10] sm:$0xf]
    %v209 = vld [vmem:[%s1 + $0x14] sm:$0xf]
    %v210 = vld [vmem:[%s2 + $0x8] sm:$0x1]
    %v211 = vpack.c.bf16 %v195, %v192
    %v212 = vpack.c.bf16 %v203, %v200
    %v217 = vunpack.c.l.b16 %v206
    %v218 = vunpack.c.l.b16 %v207
    %v219 = vunpack.c.l.b16 %v208
    %v220 = vunpack.c.l.b16 %v209
    %v221 = vpack.c.b16 %v218, %v217
    %v222 = vpack.c.b16 %v220, %v219
    %v226 = vsel %vm150, %v211, 0
    %v229 = vsel %vm150, %v212, 0
    %231 = vmatprep.subr.bf16.mxu0 0
    %232 = vmatpush1.bf16.msra.mxu0 %v221
    %233 = vmatprep.subr.bf16.mxu0 0
    %234 = vmatpush1.bf16.msra.mxu0 %v222
    %235 = vmatprep.subr.bf16.mxu0 0
    %236 = vmatpush1.bf16.msra.mxu0 0
    %237 = vmatprep.subr.bf16.mxu0 0
    %238 = vmatpush1.bf16.msra.mxu0 0
    %239 = vmatprep.subr.bf16.mxu0 0
    %240 = vmatpush1.bf16.msra.mxu0 0
    %241 = vmatprep.subr.bf16.mxu0 0
    %242 = vmatpush1.bf16.msra.mxu0 0
    %243 = vmatprep.subr.bf16.mxu0 0
    %244 = vmatpush1.bf16.msra.mxu0 0
    %245 = vmatprep.subr.bf16.mxu0 0
    %246 = vmatpush1.bf16.msra.mxu0 0
    %247 = vmatprep.subr.bf16.mxu0 0
    %248 = vmatpush1.bf16.msra.mxu0 0
    %249 = vmatprep.subr.bf16.mxu0 0
    %250 = vmatpush1.bf16.msra.mxu0 0
    %251 = vmatprep.subr.bf16.mxu0 0
    %252 = vmatpush1.bf16.msra.mxu0 0
    %253 = vmatprep.subr.bf16.mxu0 0
    %254 = vmatpush1.bf16.msra.mxu0 0
    %255 = vmatprep.subr.bf16.mxu0 0
    %256 = vmatpush1.bf16.msra.mxu0 0
    %257 = vmatprep.subr.bf16.mxu0 0
    %258 = vmatpush1.bf16.msra.mxu0 0
    %259 = vmatprep.subr.bf16.mxu0 0
    %260 = vmatpush1.bf16.msra.mxu0 0
    %261 = vmatprep.subr.bf16.mxu0 0
    %262 = vmatpush1.bf16.msra.mxu0 0
    %263 = vmatprep.mubr.bf16.mxu0 0
    %264 = vmatmul.mubr.bf16.gmra.mrb[0].mxu0 %v226
    %v265 = vpop.f32.mrb[0].mxu0
    %v266 = vadd.f32 0.0, %v265
    %v267 = vpop.f32.mrb[0].mxu0
    %v268 = vpop.f32.mrb[0].mxu0
    %v269 = vadd.f32 0.0, %v268
    %v270 = vpop.f32.mrb[0].mxu0
    %271 = vmatprep.mubr.bf16.mxu0 0
    %272 = vmatmul.mubr.bf16.gmra.mrb[0].mxu0 %v229
    %v273 = vpop.f32.mrb[0].mxu0
    %v274 = vadd.f32 0.0, %v273
    %v275 = vpop.f32.mrb[0].mxu0
    %v276 = vpop.f32.mrb[0].mxu0
    %v277 = vadd.f32 0.0, %v276
    %v278 = vpop.f32.mrb[0].mxu0
    %279 = vdwg.mxu0
    %v280 = vpack.c.bf16 %v269, %v266
    %v281 = vpack.c.bf16 %v277, %v274
    %v282 = vlaneseq
    %v283 = vshrl.u32 %v282, 7
    %v284 = vsub.s32 0, %v283
    %v285 = vrot.slane %v210, %v284
    %286 = vmatprep.subr.bf16.mxu0 0
    %287 = vmatpush1.bf16.msra.mxu0 %v280
    %288 = vmatprep.subr.bf16.mxu0 0
    %289 = vmatpush1.bf16.msra.mxu0 %v281
    %290 = vmatprep.subr.bf16.mxu0 0
    %291 = vmatpush1.bf16.msra.mxu0 0
    %292 = vmatprep.subr.bf16.mxu0 0
    %293 = vmatpush1.bf16.msra.mxu0 0
    %294 = vmatprep.subr.bf16.mxu0 0
    %295 = vmatpush1.bf16.msra.mxu0 0
    %296 = vmatprep.subr.bf16.mxu0 0
    %297 = vmatpush1.bf16.msra.mxu0 0
    %298 = vmatprep.subr.bf16.mxu0 0
    %299 = vmatpush1.bf16.msra.mxu0 0
    %300 = vmatprep.subr.bf16.mxu0 0
    %301 = vmatpush1.bf16.msra.mxu0 0
    %302 = vmatprep.subr.bf16.mxu0 0
    %303 = vmatpush1.bf16.msra.mxu0 0
    %304 = vmatprep.subr.bf16.mxu0 0
    %305 = vmatpush1.bf16.msra.mxu0 0
    %306 = vmatprep.subr.bf16.mxu0 0
    %307 = vmatpush1.bf16.msra.mxu0 0
    %308 = vmatprep.subr.bf16.mxu0 0
    %309 = vmatpush1.bf16.msra.mxu0 0
    %310 = vmatprep.subr.bf16.mxu0 0
    %311 = vmatpush1.bf16.msra.mxu0 0
    %312 = vmatprep.subr.bf16.mxu0 0
    %313 = vmatpush1.bf16.msra.mxu0 0
    %314 = vmatprep.subr.bf16.mxu0 0
    %315 = vmatpush1.bf16.msra.mxu0 0
    %316 = vmatprep.subr.bf16.mxu0 0
    %317 = vmatpush1.bf16.msra.mxu0 0
    %318 = vmatprep.mubr.bf16.mxu0 0
    %319 = vmatmul.mubr.bf16.gmra.mrb[0].mxu0 %v152
    %v320 = vpop.f32.mrb[0].mxu0
    %v321 = vadd.f32 %v285, %v320
    %v322 = vpop.f32.mrb[0].mxu0
    %v323 = vpop.f32.mrb[0].mxu0
    %v324 = vadd.f32 %v285, %v323
    %v325 = vpop.f32.mrb[0].mxu0
    %326 = vmatprep.mubr.bf16.mxu0 0
    %327 = vmatmul.mubr.bf16.gmra.mrb[0].mxu0 %v155
    %v328 = vpop.f32.mrb[0].mxu0
    %v329 = vadd.f32 %v285, %v328
    %v330 = vpop.f32.mrb[0].mxu0
    %v331 = vpop.f32.mrb[0].mxu0
    %v332 = vadd.f32 %v285, %v331
    %v333 = vpop.f32.mrb[0].mxu0
    %334 = vdwg.mxu0
    %v335 = vld [vmem:[%s1 + $0x18] sm:$0xf]
    %v336 = vld [vmem:[%s1 + $0x1c] sm:$0xf]
    %v337 = vld [vmem:[%s1 + $0x20] sm:$0xf]
    %v338 = vld [vmem:[%s1 + $0x24] sm:$0xf]
    %v339 = vld [vmem:[%s2 + $0x9] sm:$0x1]
    %v340 = vpack.c.bf16 %v324, %v321
    %v341 = vpack.c.bf16 %v332, %v329
    %v346 = vunpack.c.l.b16 %v335
    %v347 = vunpack.c.l.b16 %v336
    %v348 = vunpack.c.l.b16 %v337
    %v349 = vunpack.c.l.b16 %v338
    %v350 = vpack.c.b16 %v347, %v346
    %v351 = vpack.c.b16 %v349, %v348
    %v355 = vsel %vm150, %v340, 0
    %v358 = vsel %vm150, %v341, 0
    %360 = vmatprep.subr.bf16.mxu0 0
    %361 = vmatpush1.bf16.msra.mxu0 %v350
    %362 = vmatprep.subr.bf16.mxu0 0
    %363 = vmatpush1.bf16.msra.mxu0 %v351
    %364 = vmatprep.subr.bf16.mxu0 0
    %365 = vmatpush1.bf16.msra.mxu0 0
    %366 = vmatprep.subr.bf16.mxu0 0
    %367 = vmatpush1.bf16.msra.mxu0 0
    %368 = vmatprep.subr.bf16.mxu0 0
    %369 = vmatpush1.bf16.msra.mxu0 0
    %370 = vmatprep.subr.bf16.mxu0 0
    %371 = vmatpush1.bf16.msra.mxu0 0
    %372 = vmatprep.subr.bf16.mxu0 0
    %373 = vmatpush1.bf16.msra.mxu0 0
    %374 = vmatprep.subr.bf16.mxu0 0
    %375 = vmatpush1.bf16.msra.mxu0 0
    %376 = vmatprep.subr.bf16.mxu0 0
    %377 = vmatpush1.bf16.msra.mxu0 0
    %378 = vmatprep.subr.bf16.mxu0 0
    %379 = vmatpush1.bf16.msra.mxu0 0
    %380 = vmatprep.subr.bf16.mxu0 0
    %381 = vmatpush1.bf16.msra.mxu0 0
    %382 = vmatprep.subr.bf16.mxu0 0
    %383 = vmatpush1.bf16.msra.mxu0 0
    %384 = vmatprep.subr.bf16.mxu0 0
    %385 = vmatpush1.bf16.msra.mxu0 0
    %386 = vmatprep.subr.bf16.mxu0 0
    %387 = vmatpush1.bf16.msra.mxu0 0
    %388 = vmatprep.subr.bf16.mxu0 0
    %389 = vmatpush1.bf16.msra.mxu0 0
    %390 = vmatprep.subr.bf16.mxu0 0
    %391 = vmatpush1.bf16.msra.mxu0 0
    %392 = vmatprep.mubr.bf16.mxu0 0
    %393 = vmatmul.mubr.bf16.gmra.mrb[0].mxu0 %v355
    %v394 = vpop.f32.mrb[0].mxu0
    %v395 = vadd.f32 0.0, %v394
    %v396 = vpop.f32.mrb[0].mxu0
    %v397 = vpop.f32.mrb[0].mxu0
    %v398 = vadd.f32 0.0, %v397
    %v399 = vpop.f32.mrb[0].mxu0
    %400 = vmatprep.mubr.bf16.mxu0 0
    %401 = vmatmul.mubr.bf16.gmra.mrb[0].mxu0 %v358
    %v402 = vpop.f32.mrb[0].mxu0
    %v403 = vadd.f32 0.0, %v402
    %v404 = vpop.f32.mrb[0].mxu0
    %v405 = vpop.f32.mrb[0].mxu0
    %v406 = vadd.f32 0.0, %v405
    %v407 = vpop.f32.mrb[0].mxu0
    %408 = vdwg.mxu0
    %v409 = vpack.c.bf16 %v398, %v395
    %v410 = vpack.c.bf16 %v406, %v403
    %v411 = vlaneseq
    %v412 = vshrl.u32 %v411, 7
    %v413 = vsub.s32 0, %v412
    %v414 = vrot.slane %v339, %v413
    %415 = vmatprep.subr.bf16.mxu0 0
    %416 = vmatpush1.bf16.msra.mxu0 %v409
    %417 = vmatprep.subr.bf16.mxu0 0
    %418 = vmatpush1.bf16.msra.mxu0 %v410
    %419 = vmatprep.subr.bf16.mxu0 0
    %420 = vmatpush1.bf16.msra.mxu0 0
    %421 = vmatprep.subr.bf16.mxu0 0
    %422 = vmatpush1.bf16.msra.mxu0 0
    %423 = vmatprep.subr.bf16.mxu0 0
    %424 = vmatpush1.bf16.msra.mxu0 0
    %425 = vmatprep.subr.bf16.mxu0 0
    %426 = vmatpush1.bf16.msra.mxu0 0
    %427 = vmatprep.subr.bf16.mxu0 0
    %428 = vmatpush1.bf16.msra.mxu0 0
    %429 = vmatprep.subr.bf16.mxu0 0
    %430 = vmatpush1.bf16.msra.mxu0 0
    %431 = vmatprep.subr.bf16.mxu0 0
    %432 = vmatpush1.bf16.msra.mxu0 0
    %433 = vmatprep.subr.bf16.mxu0 0
    %434 = vmatpush1.bf16.msra.mxu0 0
    %435 = vmatprep.subr.bf16.mxu0 0
    %436 = vmatpush1.bf16.msra.mxu0 0
    %437 = vmatprep.subr.bf16.mxu0 0
    %438 = vmatpush1.bf16.msra.mxu0 0
    %439 = vmatprep.subr.bf16.mxu0 0
    %440 = vmatpush1.bf16.msra.mxu0 0
    %441 = vmatprep.subr.bf16.mxu0 0
    %442 = vmatpush1.bf16.msra.mxu0 0
    %443 = vmatprep.subr.bf16.mxu0 0
    %444 = vmatpush1.bf16.msra.mxu0 0
    %445 = vmatprep.subr.bf16.mxu0 0
    %446 = vmatpush1.bf16.msra.mxu0 0
    %447 = vmatprep.mubr.bf16.mxu0 0
    %448 = vmatmul.mubr.bf16.gmra.mrb[0].mxu0 %v152
    %v449 = vpop.f32.mrb[0].mxu0
    %v450 = vadd.f32 %v414, %v449
    %v451 = vpop.f32.mrb[0].mxu0
    %v452 = vpop.f32.mrb[0].mxu0
    %v453 = vadd.f32 %v414, %v452
    %v454 = vpop.f32.mrb[0].mxu0
    %455 = vmatprep.mubr.bf16.mxu0 0
    %456 = vmatmul.mubr.bf16.gmra.mrb[0].mxu0 %v155
    %v457 = vpop.f32.mrb[0].mxu0
    %v458 = vadd.f32 %v414, %v457
    %v459 = vpop.f32.mrb[0].mxu0
    %v460 = vpop.f32.mrb[0].mxu0
    %v461 = vadd.f32 %v414, %v460
    %v462 = vpop.f32.mrb[0].mxu0
    %463 = vdwg.mxu0
    %v464 = vpack.c.bf16 %v453, %v450
    %v465 = vpack.c.bf16 %v461, %v458
    %v466 = vlaneseq
    %v467 = vshrl.u32 %v466, 7
    %v468 = vsub.s32 0, %v467
    %v469 = vrot.slane %v57, %v468
    %v474 = vunpack.c.l.b16 %v40
    %v475 = vunpack.c.l.b16 %v41
    %v476 = vunpack.c.l.b16 %v42
    %v477 = vunpack.c.l.b16 %v43
    %v478 = vpack.c.b16 %v475, %v474
    %v479 = vpack.c.b16 %v477, %v476
    %v483 = vsel %vm150, %v464, 0
    %v486 = vsel %vm150, %v465, 0
    %488 = vmatprep.subr.bf16.mxu0 0
    %489 = vmatpush1.bf16.msra.mxu0 %v478
    %490 = vmatprep.subr.bf16.mxu0 0
    %491 = vmatpush1.bf16.msra.mxu0 %v479
    %492 = vmatprep.subr.bf16.mxu0 0
    %493 = vmatpush1.bf16.msra.mxu0 0
    %494 = vmatprep.subr.bf16.mxu0 0
    %495 = vmatpush1.bf16.msra.mxu0 0
    %496 = vmatprep.subr.bf16.mxu0 0
    %497 = vmatpush1.bf16.msra.mxu0 0
    %498 = vmatprep.subr.bf16.mxu0 0
    %499 = vmatpush1.bf16.msra.mxu0 0
    %500 = vmatprep.subr.bf16.mxu0 0
    %501 = vmatpush1.bf16.msra.mxu0 0
    %502 = vmatprep.subr.bf16.mxu0 0
    %503 = vmatpush1.bf16.msra.mxu0 0
    %504 = vmatprep.subr.bf16.mxu0 0
    %505 = vmatpush1.bf16.msra.mxu0 0
    %506 = vmatprep.subr.bf16.mxu0 0
    %507 = vmatpush1.bf16.msra.mxu0 0
    %508 = vmatprep.subr.bf16.mxu0 0
    %509 = vmatpush1.bf16.msra.mxu0 0
    %510 = vmatprep.subr.bf16.mxu0 0
    %511 = vmatpush1.bf16.msra.mxu0 0
    %512 = vmatprep.subr.bf16.mxu0 0
    %513 = vmatpush1.bf16.msra.mxu0 0
    %514 = vmatprep.subr.bf16.mxu0 0
    %515 = vmatpush1.bf16.msra.mxu0 0
    %516 = vmatprep.subr.bf16.mxu0 0
    %517 = vmatpush1.bf16.msra.mxu0 0
    %518 = vmatprep.subr.bf16.mxu0 0
    %519 = vmatpush1.bf16.msra.mxu0 0
    %520 = vmatprep.mubr.bf16.mxu0 0
    %521 = vmatmul.mubr.bf16.gmra.mrb[0].mxu0 %v483
    %v522 = vpop.f32.mrb[0].mxu0
    %v523 = vadd.f32 %v469, %v522
    %v524 = vpop.f32.mrb[0].mxu0
    %v525 = vpop.f32.mrb[0].mxu0
    %v526 = vadd.f32 %v469, %v525
    %v527 = vpop.f32.mrb[0].mxu0
    %528 = vmatprep.mubr.bf16.mxu0 0
    %529 = vmatmul.mubr.bf16.gmra.mrb[0].mxu0 %v486
    %v530 = vpop.f32.mrb[0].mxu0
    %v531 = vadd.f32 %v469, %v530
    %v532 = vpop.f32.mrb[0].mxu0
    %v533 = vpop.f32.mrb[0].mxu0
    %v534 = vadd.f32 %v469, %v533
    %v535 = vpop.f32.mrb[0].mxu0
    %536 = vdwg.mxu0
    %v537 = vtanh.pop %v523
    %v538 = vtanh.pop %v526
    %v539 = vtanh.pop %v531
    %v540 = vtanh.pop %v534
    %v541 = vpack.c.bf16 %v538, %v537
    %v542 = vpack.c.bf16 %v540, %v539
    %v543 = vlaneseq
    %v544 = vshrl.u32 %v543, 7
    %v545 = vsub.s32 0, %v544
    %v546 = vrot.slane %v58, %v545
    %v551 = vunpack.c.l.b16 %v48
    %v552 = vunpack.c.l.b16 %v49
    %v553 = vunpack.c.l.b16 %v50
    %v554 = vunpack.c.l.b16 %v51
    %v555 = vpack.c.b16 %v552, %v551
    %v556 = vpack.c.b16 %v554, %v553
    %v560 = vsel %vm150, %v541, 0
    %v563 = vsel %vm150, %v542, 0
    %565 = vmatprep.subr.bf16.mxu0 0
    %566 = vmatpush1.bf16.msra.mxu0 %v555
    %567 = vmatprep.subr.bf16.mxu0 0
    %568 = vmatpush1.bf16.msra.mxu0 %v556
    %569 = vmatprep.subr.bf16.mxu0 0
    %570 = vmatpush1.bf16.msra.mxu0 0
    %571 = vmatprep.subr.bf16.mxu0 0
    %572 = vmatpush1.bf16.msra.mxu0 0
    %573 = vmatprep.subr.bf16.mxu0 0
    %574 = vmatpush1.bf16.msra.mxu0 0
    %575 = vmatprep.subr.bf16.mxu0 0
    %576 = vmatpush1.bf16.msra.mxu0 0
    %577 = vmatprep.subr.bf16.mxu0 0
    %578 = vmatpush1.bf16.msra.mxu0 0
    %579 = vmatprep.subr.bf16.mxu0 0
    %580 = vmatpush1.bf16.msra.mxu0 0
    %581 = vmatprep.subr.bf16.mxu0 0
    %582 = vmatpush1.bf16.msra.mxu0 0
    %583 = vmatprep.subr.bf16.mxu0 0
    %584 = vmatpush1.bf16.msra.mxu0 0
    %585 = vmatprep.subr.bf16.mxu0 0
    %586 = vmatpush1.bf16.msra.mxu0 0
    %587 = vmatprep.subr.bf16.mxu0 0
    %588 = vmatpush1.bf16.msra.mxu0 0
    %589 = vmatprep.subr.bf16.mxu0 0
    %590 = vmatpush1.bf16.msra.mxu0 0
    %591 = vmatprep.subr.bf16.mxu0 0
    %592 = vmatpush1.bf16.msra.mxu0 0
    %593 = vmatprep.subr.bf16.mxu0 0
    %594 = vmatpush1.bf16.msra.mxu0 0
    %595 = vmatprep.subr.bf16.mxu0 0
    %596 = vmatpush1.bf16.msra.mxu0 0
    %597 = vmatprep.mubr.bf16.mxu0 0
    %598 = vmatmul.mubr.bf16.gmra.mrb[0].mxu0 %v560
    %v599 = vpop.f32.mrb[0].mxu0
    %v600 = vadd.f32 %v546, %v599
    %v601 = vpop.f32.mrb[0].mxu0
    %v602 = vpop.f32.mrb[0].mxu0
    %v603 = vadd.f32 %v546, %v602
    %v604 = vpop.f32.mrb[0].mxu0
    %605 = vmatprep.mubr.bf16.mxu0 0
    %606 = vmatmul.mubr.bf16.gmra.mrb[0].mxu0 %v563
    %v607 = vpop.f32.mrb[0].mxu0
    %v608 = vadd.f32 %v546, %v607
    %v609 = vpop.f32.mrb[0].mxu0
    %v610 = vpop.f32.mrb[0].mxu0
    %v611 = vadd.f32 %v546, %v610
    %v612 = vpop.f32.mrb[0].mxu0
    %613 = vdwg.mxu0
    %vm614 = vcmask 15360
    %v615 = vsel %vm614, %v600, -inf
    %616 = vmax.xlane.f32.xlu0 %v615
    %v617 = vpop.xlane.xlu0 %616
    %v618 = vsel %vm614, %v603, -inf
    %619 = vmax.xlane.f32.xlu0 %v618
    %v620 = vpop.xlane.xlu0 %619
    %v621 = vsel %vm614, %v608, -inf
    %622 = vmax.xlane.f32.xlu0 %v621
    %v623 = vpop.xlane.xlu0 %622
    %v624 = vsel %vm614, %v611, -inf
    %625 = vmax.xlane.f32.xlu0 %v624
    %v626 = vpop.xlane.xlu0 %625
    %v627 = vsub.f32 %v600, %v617
    %v628 = vsub.f32 %v603, %v620
    %v629 = vsub.f32 %v608, %v623
    %v630 = vsub.f32 %v611, %v626
    %v631 = vmul.f32 %v627, 1.442695
    %v632 = vpow.pop %v631
    %v633 = vmul.f32 %v628, 1.442695
    %v634 = vpow.pop %v633
    %v635 = vmul.f32 %v629, 1.442695
    %v636 = vpow.pop %v635
    %v637 = vmul.f32 %v630, 1.442695
    %v638 = vpow.pop %v637
    %v639 = vsel %vm614, %v632, 0.0
    %640 = vadd.xlane.f32.xlu0 %v639
    %v641 = vpop.xlane.xlu0 %640
    %v642 = vsel %vm614, %v634, 0.0
    %643 = vadd.xlane.f32.xlu0 %v642
    %v644 = vpop.xlane.xlu0 %643
    %v645 = vsel %vm614, %v636, 0.0
    %646 = vadd.xlane.f32.xlu0 %v645
    %v647 = vpop.xlane.xlu0 %646
    %v648 = vsel %vm614, %v638, 0.0
    %649 = vadd.xlane.f32.xlu0 %v648
    %v650 = vpop.xlane.xlu0 %649
    %v651 = vrcp.pop %v641
    %v652 = vmul.f32 %v632, %v651
    %v653 = vrcp.pop %v644
    %v654 = vmul.f32 %v634, %v653
    %v655 = vrcp.pop %v647
    %v656 = vmul.f32 %v636, %v655
    %v657 = vrcp.pop %v650
    %v658 = vmul.f32 %v638, %v657
    %660 = vset.pattern.permute.xlu0 0
    %661 = vperm.xlu0 %660, %v652
    %v662 = vpop.permute.xlu0 %661
    %665 = vset.pattern.permute.xlu0 0
    %666 = vperm.xlu0 %665, %v654
    %v667 = vpop.permute.xlu0 %666
    %670 = vset.pattern.permute.xlu0 0
    %671 = vperm.xlu0 %670, %v656
    %v672 = vpop.permute.xlu0 %671
    %675 = vset.pattern.permute.xlu0 0
    %676 = vperm.xlu0 %675, %v658
    %v677 = vpop.permute.xlu0 %676
    %v679 = vmul.f32 %v30, %v662
    %v680 = vmul.f32 %v31, %v667
    %v681 = vmul.f32 %v32, %v672
    %v682 = vmul.f32 %v33, %v677
    %683 = vset.pattern.permute.xlu0 1
    %684 = vperm.xlu0 %683, %v652
    %v685 = vpop.permute.xlu0 %684
    %687 = vset.pattern.permute.xlu0 1
    %688 = vperm.xlu0 %687, %v654
    %v689 = vpop.permute.xlu0 %688
    %691 = vset.pattern.permute.xlu0 1
    %692 = vperm.xlu0 %691, %v656
    %v693 = vpop.permute.xlu0 %692
    %695 = vset.pattern.permute.xlu0 1
    %696 = vperm.xlu0 %695, %v658
    %v697 = vpop.permute.xlu0 %696
    %v699 = vmul.f32 %v30, %v685
    %v700 = vmul.f32 %v31, %v689
    %v701 = vmul.f32 %v32, %v693
    %v702 = vmul.f32 %v33, %v697
    %707 = vrot.lane.b32.xlu0 %v699, 4
    %v708 = vpop.permute.xlu0 %707
    %709 = vrot.lane.b32.xlu0 %v700, 4
    %v710 = vpop.permute.xlu0 %709
    %711 = vrot.lane.b32.xlu0 %v701, 4
    %v712 = vpop.permute.xlu0 %711
    %713 = vrot.lane.b32.xlu0 %v702, 4
    %v714 = vpop.permute.xlu0 %713
    %vm719 = vcmask 31744
    %v720 = vsel %vm719, %v679, %v708
    %v721 = vsel %vm719, %v680, %v710
    %v722 = vsel %vm719, %v681, %v712
    %v723 = vsel %vm719, %v682, %v714
    %v724 = vpack.c.bf16 %v721, %v720
    %v725 = vpack.c.bf16 %v723, %v722
    %726 = vxpose.xlu0.c.b16.start [1/8] %v724, 128
    %727 = vxpose.xlu0.c.b16.cont [2/8] %v725, 128
    %728 = vxpose.xlu0.c.b16.cont [3/8] 0, 128
    %729 = vxpose.xlu0.c.b16.cont [4/8] 0, 128
    %730 = vxpose.xlu0.c.b16.cont [5/8] 0, 128
    %731 = vxpose.xlu0.c.b16.cont [6/8] 0, 128
    %732 = vxpose.xlu0.c.b16.cont [7/8] 0, 128
    %733 = vxpose.xlu0.c.b16.end [8/8] 0, 128
    %v734 = vpop.trf.xlu0
    %v735 = vpop.trf.xlu0
    %v736 = vpop.trf.xlu0
    %v737 = vpop.trf.xlu0
    %v738 = vpop.trf.xlu0
    %v739 = vpop.trf.xlu0
    %v740 = vpop.trf.xlu0
    %v741 = vpop.trf.xlu0
    %v743 = vsel %vm150, %v734, 0
    %745 = vmatprep.subr.bf16.mxu0 0
    %746 = vmatpush1.bf16.msra.mxu0 %v464
    %747 = vmatprep.subr.bf16.mxu0 0
    %748 = vmatpush1.bf16.msra.mxu0 %v465
    %749 = vmatprep.subr.bf16.mxu0 0
    %750 = vmatpush1.bf16.msra.mxu0 0
    %751 = vmatprep.subr.bf16.mxu0 0
    %752 = vmatpush1.bf16.msra.mxu0 0
    %753 = vmatprep.subr.bf16.mxu0 0
    %754 = vmatpush1.bf16.msra.mxu0 0
    %755 = vmatprep.subr.bf16.mxu0 0
    %756 = vmatpush1.bf16.msra.mxu0 0
    %757 = vmatprep.subr.bf16.mxu0 0
    %758 = vmatpush1.bf16.msra.mxu0 0
    %759 = vmatprep.subr.bf16.mxu0 0
    %760 = vmatpush1.bf16.msra.mxu0 0
    %761 = vmatprep.subr.bf16.mxu0 0
    %762 = vmatpush1.bf16.msra.mxu0 0
    %763 = vmatprep.subr.bf16.mxu0 0
    %764 = vmatpush1.bf16.msra.mxu0 0
    %765 = vmatprep.subr.bf16.mxu0 0
    %766 = vmatpush1.bf16.msra.mxu0 0
    %767 = vmatprep.subr.bf16.mxu0 0
    %768 = vmatpush1.bf16.msra.mxu0 0
    %769 = vmatprep.subr.bf16.mxu0 0
    %770 = vmatpush1.bf16.msra.mxu0 0
    %771 = vmatprep.subr.bf16.mxu0 0
    %772 = vmatpush1.bf16.msra.mxu0 0
    %773 = vmatprep.subr.bf16.mxu0 0
    %774 = vmatpush1.bf16.msra.mxu0 0
    %775 = vmatprep.subr.bf16.mxu0 0
    %776 = vmatpush1.bf16.msra.mxu0 0
    %777 = vmatprep.mubr.bf16.mxu0 0
    %778 = vmatmul.mubr.bf16.gmra.mrb[0].mxu0 %v743
    %v779 = vpop.f32.mrb[0].mxu0
    %v780 = vadd.f32 0.0, %v779
    %v781 = vpop.f32.mrb[0].mxu0
    %v782 = vpop.f32.mrb[0].mxu0
    %v783 = vpop.f32.mrb[0].mxu0
    %784 = vdwg.mxu0
    %v785 = vsel %vm150, %v450, 0.0
    %v786 = vsel %vm150, %v453, 0.0
    %v787 = vadd.f32 %v785, %v786
    %v788 = vsel %vm150, %v458, 0.0
    %v789 = vadd.f32 %v787, %v788
    %v790 = vsel %vm150, %v461, 0.0
    %v791 = vadd.f32 %v789, %v790
    %v792 = vrot.slane %v791, 4
    %v793 = vadd.f32 %v791, %v792
    %v794 = vrot.slane %v793, 2
    %v795 = vadd.f32 %v793, %v794
    %v796 = vrot.slane %v795, 1
    %v797 = vadd.f32 %v795, %v796
    %v798 = vrcp.pop 32.0
    %v799 = vmul.f32 %v797, %v798
    %v804 = vunpack.c.l.b16 %v20
    %v805 = vunpack.c.l.b16 %v21
    %v806 = vunpack.c.l.b16 %v22
    %v807 = vunpack.c.l.b16 %v23
    %v808 = vpack.c.b16 %v805, %v804
    %v809 = vpack.c.b16 %v807, %v806
    %812 = vmatprep.subr.bf16.mxu0 0
    %813 = vmatpush1.bf16.msra.mxu0 %v808
    %814 = vmatprep.subr.bf16.mxu0 0
    %815 = vmatpush1.bf16.msra.mxu0 %v809
    %816 = vmatprep.subr.bf16.mxu0 0
    %817 = vmatpush1.bf16.msra.mxu0 0
    %818 = vmatprep.subr.bf16.mxu0 0
    %819 = vmatpush1.bf16.msra.mxu0 0
    %820 = vmatprep.subr.bf16.mxu0 0
    %821 = vmatpush1.bf16.msra.mxu0 0
    %822 = vmatprep.subr.bf16.mxu0 0
    %823 = vmatpush1.bf16.msra.mxu0 0
    %824 = vmatprep.subr.bf16.mxu0 0
    %825 = vmatpush1.bf16.msra.mxu0 0
    %826 = vmatprep.subr.bf16.mxu0 0
    %827 = vmatpush1.bf16.msra.mxu0 0
    %828 = vmatprep.subr.bf16.mxu0 0
    %829 = vmatpush1.bf16.msra.mxu0 0
    %830 = vmatprep.subr.bf16.mxu0 0
    %831 = vmatpush1.bf16.msra.mxu0 0
    %832 = vmatprep.subr.bf16.mxu0 0
    %833 = vmatpush1.bf16.msra.mxu0 0
    %834 = vmatprep.subr.bf16.mxu0 0
    %835 = vmatpush1.bf16.msra.mxu0 0
    %836 = vmatprep.subr.bf16.mxu0 0
    %837 = vmatpush1.bf16.msra.mxu0 0
    %838 = vmatprep.subr.bf16.mxu0 0
    %839 = vmatpush1.bf16.msra.mxu0 0
    %840 = vmatprep.subr.bf16.mxu0 0
    %841 = vmatpush1.bf16.msra.mxu0 0
    %842 = vmatprep.subr.bf16.mxu0 0
    %843 = vmatpush1.bf16.msra.mxu0 0
    %844 = vmatprep.mubr.bf16.mxu0 0
    %845 = vmatmul.mubr.bf16.gmra.mrb[0].mxu0 %v743
    %v846 = vpop.f32.mrb[0].mxu0
    %v847 = vadd.f32 0.0, %v846
    %v848 = vpop.f32.mrb[0].mxu0
    %v849 = vpop.f32.mrb[0].mxu0
    %v850 = vpop.f32.mrb[0].mxu0
    %851 = vdwg.mxu0
    %v853 = vrot.slane %v25, 4
    %vm855 = vcmask 1043456
    %v856 = vsel %vm855, %v25, %v853
    %v857 = vmul.f32 %v847, %v856
    %v858 = vpack.c.bf16 %v857, %v857
    %v859 = vpack.c.bf16 %v654, %v652
    %v860 = vpack.c.bf16 %v658, %v656
    %v862 = vsel %vm150, %v858, 0
    %864 = vmatprep.subr.bf16.mxu0 0
    %865 = vmatpush1.bf16.msra.mxu0 %v859
    %866 = vmatprep.subr.bf16.mxu0 0
    %867 = vmatpush1.bf16.msra.mxu0 %v860
    %868 = vmatprep.subr.bf16.mxu0 0
    %869 = vmatpush1.bf16.msra.mxu0 0
    %870 = vmatprep.subr.bf16.mxu0 0
    %871 = vmatpush1.bf16.msra.mxu0 0
    %872 = vmatprep.subr.bf16.mxu0 0
    %873 = vmatpush1.bf16.msra.mxu0 0
    %874 = vmatprep.subr.bf16.mxu0 0
    %875 = vmatpush1.bf16.msra.mxu0 0
    %876 = vmatprep.subr.bf16.mxu0 0
    %877 = vmatpush1.bf16.msra.mxu0 0
    %878 = vmatprep.subr.bf16.mxu0 0
    %879 = vmatpush1.bf16.msra.mxu0 0
    %880 = vmatprep.subr.bf16.mxu0 0
    %881 = vmatpush1.bf16.msra.mxu0 0
    %882 = vmatprep.subr.bf16.mxu0 0
    %883 = vmatpush1.bf16.msra.mxu0 0
    %884 = vmatprep.subr.bf16.mxu0 0
    %885 = vmatpush1.bf16.msra.mxu0 0
    %886 = vmatprep.subr.bf16.mxu0 0
    %887 = vmatpush1.bf16.msra.mxu0 0
    %888 = vmatprep.subr.bf16.mxu0 0
    %889 = vmatpush1.bf16.msra.mxu0 0
    %890 = vmatprep.subr.bf16.mxu0 0
    %891 = vmatpush1.bf16.msra.mxu0 0
    %892 = vmatprep.subr.bf16.mxu0 0
    %893 = vmatpush1.bf16.msra.mxu0 0
    %894 = vmatprep.subr.bf16.mxu0 0
    %895 = vmatpush1.bf16.msra.mxu0 0
    %896 = vmatprep.mubr.bf16.mxu0 0
    %897 = vmatmul.mubr.bf16.gmra.mrb[0].mxu0 %v862
    %v898 = vpop.f32.mrb[0].mxu0
    %v899 = vadd.f32 0.0, %v898
    %v900 = vpop.f32.mrb[0].mxu0
    %v901 = vpop.f32.mrb[0].mxu0
    %v902 = vpop.f32.mrb[0].mxu0
    %903 = vdwg.mxu0
    %v904 = vand.u32 2147483647, %v899
    %906 = vrot.lane.b32.xlu0 %v904, 127
    %v907 = vpop.permute.xlu0 %906
    %v909 = vadd.f32 %v904, %v907
    %v910 = vmax.f32 %v909, 1e-05
    %v911 = vrcp.pop %v910
    %v912 = vmul.f32 %v899, %v911
    %914 = vrot.lane.b32.xlu0 %v910, 1
    %v915 = vpop.permute.xlu0 %914
    %v917 = vrcp.pop %v915
    %v918 = vmul.f32 %v899, %v917
    %v919 = vsub.f32 %v912, 1.0
    %v920 = vmul.f32 %v919, %v919
    %v921 = vsub.f32 %v918, 1.0
    %v922 = vmul.f32 %v921, %v921
    %v924 = vrot.slane %v922, 4
    %925 = vrot.lane.b32.xlu0 %v924, 127
    %v926 = vpop.permute.xlu0 %925
    %v928 = vadd.f32 %v920, %v926
    %v929 = vmul.f32 %v928, 0.5
    %vm930 = vcmask 3072
    %v931 = vsel %vm930, %v929, 0.0
    %v932 = vrot.slane %v931, 4
    %v933 = vadd.f32 %v931, %v932
    %v934 = vrot.slane %v933, 2
    %v935 = vadd.f32 %v933, %v934
    %v936 = vrot.slane %v935, 1
    %v937 = vadd.f32 %v935, %v936
    %v938 = vmul.f32 %v937, 0.25
    %v939 = vmul.f32 %v780, %v780
    %vm940 = vcmask 257024
    %v941 = vsel %vm940, %v939, 0.0
    %942 = vadd.xlane.f32.xlu0 %v941
    %v943 = vpop.xlane.xlu0 %942
    %v944 = vsel %vm855, %v943, 0.0
    %v945 = vrot.slane %v944, 4
    %v946 = vadd.f32 %v944, %v945
    %v947 = vrot.slane %v946, 2
    %v948 = vadd.f32 %v946, %v947
    %v949 = vrot.slane %v948, 1
    %v950 = vadd.f32 %v948, %v949
    %v951 = vmul.f32 %v950, 0.0078125
    %vm952 = vcmp.gt.f32.partialorder %v951, 1.0
    %v953 = vrsqrt.pop %v951
    %v954 = vsel %vm952, %v953, 1.0
    %v955 = vmul.f32 %v780, %v954
    %v956 = vadd.f32 %v955, %v61
    %v957 = vmul.f32 %v799, %v799
    %v958 = vsel %vm150, %v957, 0.0
    %959 = vadd.xlane.f32.xlu0 %v958
    %v960 = vpop.xlane.xlu0 %959
    %v961 = vsel %vm855, %v960, 0.0
    %v962 = vrot.slane %v961, 4
    %v963 = vadd.f32 %v961, %v962
    %v964 = vrot.slane %v963, 2
    %v965 = vadd.f32 %v963, %v964
    %v966 = vrot.slane %v965, 1
    %v967 = vadd.f32 %v965, %v966
    %v968 = vmul.f32 %v967, 0.0078125
    %vm969 = vcmp.gt.f32.partialorder %v968, 1.0
    %v970 = vrsqrt.pop %v968
    %v971 = vsel %vm969, %v970, 1.0
    %v972 = vmul.f32 %v799, %v971
    %v973 = vpack.c.bf16 %v956, %v956
    %v974 = vlaneseq
    %v975 = vshrl.u32 %v974, 7
    %v976 = vsub.s32 0, %v975
    %v977 = vrot.slane %v59, %v976
    %v982 = vunpack.c.l.b16 %v44
    %v983 = vunpack.c.l.b16 %v45
    %v984 = vunpack.c.l.b16 %v46
    %v985 = vunpack.c.l.b16 %v47
    %v986 = vpack.c.b16 %v983, %v982
    %v987 = vpack.c.b16 %v985, %v984
    %v991 = vsel %vm150, %v973, 0
    %993 = vmatprep.subr.bf16.mxu0 0
    %994 = vmatpush1.bf16.msra.mxu0 %v986
    %995 = vmatprep.subr.bf16.mxu0 0
    %996 = vmatpush1.bf16.msra.mxu0 %v987
    %997 = vmatprep.subr.bf16.mxu0 0
    %998 = vmatpush1.bf16.msra.mxu0 0
    %999 = vmatprep.subr.bf16.mxu0 0
    %1000 = vmatpush1.bf16.msra.mxu0 0
    %1001 = vmatprep.subr.bf16.mxu0 0
    %1002 = vmatpush1.bf16.msra.mxu0 0
    %1003 = vmatprep.subr.bf16.mxu0 0
    %1004 = vmatpush1.bf16.msra.mxu0 0
    %1005 = vmatprep.subr.bf16.mxu0 0
    %1006 = vmatpush1.bf16.msra.mxu0 0
    %1007 = vmatprep.subr.bf16.mxu0 0
    %1008 = vmatpush1.bf16.msra.mxu0 0
    %1009 = vmatprep.subr.bf16.mxu0 0
    %1010 = vmatpush1.bf16.msra.mxu0 0
    %1011 = vmatprep.subr.bf16.mxu0 0
    %1012 = vmatpush1.bf16.msra.mxu0 0
    %1013 = vmatprep.subr.bf16.mxu0 0
    %1014 = vmatpush1.bf16.msra.mxu0 0
    %1015 = vmatprep.subr.bf16.mxu0 0
    %1016 = vmatpush1.bf16.msra.mxu0 0
    %1017 = vmatprep.subr.bf16.mxu0 0
    %1018 = vmatpush1.bf16.msra.mxu0 0
    %1019 = vmatprep.subr.bf16.mxu0 0
    %1020 = vmatpush1.bf16.msra.mxu0 0
    %1021 = vmatprep.subr.bf16.mxu0 0
    %1022 = vmatpush1.bf16.msra.mxu0 0
    %1023 = vmatprep.subr.bf16.mxu0 0
    %1024 = vmatpush1.bf16.msra.mxu0 0
    %1025 = vmatprep.mubr.bf16.mxu0 0
    %1026 = vmatmul.mubr.bf16.gmra.mrb[0].mxu0 %v991
    %v1027 = vpop.f32.mrb[0].mxu0
    %v1028 = vadd.f32 %v977, %v1027
    %v1029 = vpop.f32.mrb[0].mxu0
    %v1030 = vpop.f32.mrb[0].mxu0
    %v1031 = vpop.f32.mrb[0].mxu0
    %1032 = vdwg.mxu0
    %v1033 = vmax.f32 %v1028, 0.0
    %v1034 = vpack.c.bf16 %v1033, %v1033
    %v1035 = vlaneseq
    %v1036 = vshrl.u32 %v1035, 7
    %v1037 = vsub.s32 0, %v1036
    %v1038 = vrot.slane %v60, %v1037
    %v1043 = vunpack.c.l.b16 %v52
    %v1044 = vunpack.c.l.b16 %v53
    %v1045 = vunpack.c.l.b16 %v54
    %v1046 = vunpack.c.l.b16 %v55
    %v1047 = vpack.c.b16 %v1044, %v1043
    %v1048 = vpack.c.b16 %v1046, %v1045
    %v1052 = vsel %vm150, %v1034, 0
    %1054 = vmatprep.subr.bf16.mxu0 0
    %1055 = vmatpush1.bf16.msra.mxu0 %v1047
    %1056 = vmatprep.subr.bf16.mxu0 0
    %1057 = vmatpush1.bf16.msra.mxu0 %v1048
    %1058 = vmatprep.subr.bf16.mxu0 0
    %1059 = vmatpush1.bf16.msra.mxu0 0
    %1060 = vmatprep.subr.bf16.mxu0 0
    %1061 = vmatpush1.bf16.msra.mxu0 0
    %1062 = vmatprep.subr.bf16.mxu0 0
    %1063 = vmatpush1.bf16.msra.mxu0 0
    %1064 = vmatprep.subr.bf16.mxu0 0
    %1065 = vmatpush1.bf16.msra.mxu0 0
    %1066 = vmatprep.subr.bf16.mxu0 0
    %1067 = vmatpush1.bf16.msra.mxu0 0
    %1068 = vmatprep.subr.bf16.mxu0 0
    %1069 = vmatpush1.bf16.msra.mxu0 0
    %1070 = vmatprep.subr.bf16.mxu0 0
    %1071 = vmatpush1.bf16.msra.mxu0 0
    %1072 = vmatprep.subr.bf16.mxu0 0
    %1073 = vmatpush1.bf16.msra.mxu0 0
    %1074 = vmatprep.subr.bf16.mxu0 0
    %1075 = vmatpush1.bf16.msra.mxu0 0
    %1076 = vmatprep.subr.bf16.mxu0 0
    %1077 = vmatpush1.bf16.msra.mxu0 0
    %1078 = vmatprep.subr.bf16.mxu0 0
    %1079 = vmatpush1.bf16.msra.mxu0 0
    %1080 = vmatprep.subr.bf16.mxu0 0
    %1081 = vmatpush1.bf16.msra.mxu0 0
    %1082 = vmatprep.subr.bf16.mxu0 0
    %1083 = vmatpush1.bf16.msra.mxu0 0
    %1084 = vmatprep.subr.bf16.mxu0 0
    %1085 = vmatpush1.bf16.msra.mxu0 0
    %1086 = vmatprep.mubr.bf16.mxu0 0
    %1087 = vmatmul.mubr.bf16.gmra.mrb[0].mxu0 %v1052
    %v1088 = vpop.f32.mrb[0].mxu0
    %v1089 = vadd.f32 %v1038, %v1088
    %v1090 = vpop.f32.mrb[0].mxu0
    %v1091 = vpop.f32.mrb[0].mxu0
    %v1092 = vpop.f32.mrb[0].mxu0
    %1093 = vdwg.mxu0
    %vm1094 = vcmask 27648
    %v1095 = vsel %vm1094, %v1089, -inf
    %1096 = vmax.xlane.f32.xlu0 %v1095
    %v1097 = vpop.xlane.xlu0 %1096
    %v1098 = vsub.f32 %v1089, %v1097
    %v1099 = vmul.f32 %v1098, 1.442695
    %v1100 = vpow.pop %v1099
    %v1101 = vsel %vm1094, %v1100, 0.0
    %1102 = vadd.xlane.f32.xlu0 %v1101
    %v1103 = vpop.xlane.xlu0 %1102
    %v1104 = vlog2.pop %v1103
    %v1105 = vmul.f32 %v1104, 0.6931472
    %v1106 = vadd.f32 %v1105, %v1097
    %v1107 = vsub.f32 %v1089, %v1106
    %1109 = vrot.lane.b32.xlu0 %v972, 32
    %v1110 = vpop.permute.xlu0 %1109
    %1113 = vrot.lane.b32.xlu0 %v1107, 64
    %v1114 = vpop.permute.xlu0 %1113
    %1117 = vrot.lane.b32.xlu0 %v938, 68
    %v1118 = vpop.permute.xlu0 %1117
    %v1120 = vsel %vm150, %v956, %v1110
    %vm1121 = vcmask 523264
    %v1122 = vsel %vm1121, %v1120, %v1114
    %vm1123 = vcmask 556032
    %v1124 = vsel %vm1123, %v1122, %v1118
    %vm1125 = vcmask 564224
    %v1126 = vsel %vm1125, %v1124, 0.0
    %1127 = vst [vmem:[#allocation2] sm:$0xf] %v1126
    // Predicated region
    $region14: #{tpu_custom_call.1} parent=1 // pred_check
      _
    $region15: #{tpu_custom_call.1} parent=1 // pred_check_branch
      %1129 = sbr.rel (0) target = $region17
    $region16: #{tpu_custom_call.1} parent=1 // pred_region
      %s1131 = ssub.s32 64, 64
      %1132 = vsyncadd [#allocation3], %s1131
      %s1134 = sshll.u32 [#allocation2], 4
      %s1135 = int_to_ptr.vmem [resolvable:$true] %s1134
      %1137 = dma.vmem_to_hbm [thread:$0]  %s1135, 64, %s3, [#allocation3]
    $region17: #{tpu_custom_call.1} parent=1 // pred_fallthru
      _
    // Predicated region
    $region18: #{tpu_custom_call.1} parent=1 // pred_check
      _
    $region19: #{tpu_custom_call.1} parent=1 // pred_check_branch
      %1139 = sbr.rel (0) target = $region21
    $region20: #{tpu_custom_call.1} parent=1 // pred_region
      %1140 = dma.done [#allocation3], 64
    $region21: #{tpu_custom_call.1} parent=1 // pred_fallthru
      _
    %1141 = vsyncpa [#allocation3], 1

</llo_original>
